<compile_context>
chip_gen: v5e
topology: v5e:2x2
jax: 0.10.0
libtpu: 0.0.40
codegen_flags: <defaults>
</compile_context>

<pallas_src>
import math

import jax
import jax.numpy as jnp
from jax.experimental import pallas as pl
from jax.experimental.pallas import tpu as pltpu

LAYER_SIZES = (46, 128, 128, 128, 1)
BN_EPS = 1e-5
INV_SQRT2 = 1.0 / math.sqrt(2.0)
TILE_N_MAX = 1024  # rows per grid step; comfortably inside VMEM on v5e/v6e/v7x


def _round_up(a, b):
    return ((a + b - 1) // b) * b


# ---------------------------------------------------------------------------
# In-kernel math helpers (only exp / log / max / where / arithmetic -> all have
# guaranteed Mosaic lowerings; exp runs on the EUP slot).
# ---------------------------------------------------------------------------
def _erf_poly(u):
    """Abramowitz & Stegun 7.1.26 erf approximation, |abs err| <= 1.5e-7."""
    a1, a2, a3, a4, a5 = (0.254829592, -0.284496736, 1.421413741,
                          -1.453152027, 1.061405429)
    p = 0.3275911
    au = jnp.abs(u)
    t = 1.0 / (1.0 + p * au)
    poly = t * (a1 + t * (a2 + t * (a3 + t * (a4 + t * a5))))
    y = 1.0 - poly * jnp.exp(-au * au)
    return jnp.where(u >= 0.0, y, -y)


def _gelu_kernel(x):
    # PyTorch nn.GELU(approximate='none'): 0.5 * x * (1 + erf(x / sqrt(2)))
    return 0.5 * x * (1.0 + _erf_poly(x * INV_SQRT2))


def _softplus_kernel(x):
    # Numerically stable softplus (matches torch.nn.Softplus(beta=1)).
    return jnp.maximum(x, 0.0) + jnp.log(1.0 + jnp.exp(-jnp.abs(x)))


# ---------------------------------------------------------------------------
# Fused kernel
# ---------------------------------------------------------------------------
def mlp_kernel(x_ref,
               w1_ref, b1_ref,
               w2_ref, b2_ref,
               w3_ref, b3_ref,
               w4t_ref, b4_ref,
               o_ref):
    """Fused forward for one batch tile.

    Hidden weights are (in, out) with BatchNorm already folded in; b{i} are
    (1, out).  w4t is the final weight in PyTorch layout (1, 128); b4 is (1, 1).
    Output tile is (1, TILE_N): the result for row n of the tile lands in lane n.
    """
    h = x_ref[...].astype(jnp.float32)
    for w_ref, b_ref in ((w1_ref, b1_ref), (w2_ref, b2_ref), (w3_ref, b3_ref)):
        z = jnp.dot(h, w_ref[...], preferred_element_type=jnp.float32) + b_ref[...]
        h = _gelu_kernel(z)  # Dropout(p=0.5) is identity in eval mode
    # Final Linear 128->1, computed transposed so the per-row scalars are
    # lane-dense: (1,128) @ (128, TILE_N) -> (1, TILE_N).
    z = jnp.dot(w4t_ref[...], h.T, preferred_element_type=jnp.float32) + b4_ref[...]
    o_ref[...] = _softplus_kernel(z).astype(o_ref.dtype)


# ---------------------------------------------------------------------------
# Wrapper
# ---------------------------------------------------------------------------
def fold_batchnorm(params):
    """Fold eval-mode BatchNorm1d into the preceding Linear (exact up to f32)."""
    fused = {}
    for i in (1, 2, 3):
        w, b = params[f"w{i}"], params[f"b{i}"]
        s = params[f"gamma{i}"] * jax.lax.rsqrt(params[f"var{i}"] + BN_EPS)
        fused[f"w{i}"] = w * s[None, :]
        fused[f"b{i}"] = ((b - params[f"mean{i}"]) * s + params[f"beta{i}"])[None, :]
    fused["w4t"] = params["w4"].T                    # (1, 128) — PyTorch layout
    fused["b4"] = params["b4"].reshape(1, 1)
    return fused


def custom_network_forward(x, params):
    """x: (N, 46) float32; params: dict from init_params.  Returns (N, 1)."""
    n, f = x.shape
    assert f == LAYER_SIZES[0], (n, f)
    fused = fold_batchnorm(params)

    tile_n = min(TILE_N_MAX, _round_up(max(n, 1), 128))
    n_pad = _round_up(n, tile_n)
    if n_pad != n:
        x = jnp.pad(x, ((0, n_pad - n), (0, 0)))
    grid = (n_pad // tile_n,)

    def resident(arr):
        # Full-array block with a constant index_map: stays in VMEM across steps.
        return pl.BlockSpec(arr.shape, lambda i: (0, 0))

    inputs = (x,
              fused["w1"], fused["b1"],
              fused["w2"], fused["b2"],
              fused["w3"], fused["b3"],
              fused["w4t"], fused["b4"])

    out_t = pl.pallas_call(
        mlp_kernel,
        out_shape=jax.ShapeDtypeStruct((1, n_pad), jnp.float32),
        grid=grid,
        in_specs=[
            pl.BlockSpec((tile_n, f), lambda i: (i, 0)),
            resident(fused["w1"]), resident(fused["b1"]),
            resident(fused["w2"]), resident(fused["b2"]),
            resident(fused["w3"]), resident(fused["b3"]),
            resident(fused["w4t"]), resident(fused["b4"]),
        ],
        out_specs=pl.BlockSpec((1, tile_n), lambda i: (0, i)),
        compiler_params=pltpu.CompilerParams(
            dimension_semantics=("parallel",)),
    )(*inputs)

    # Lane-dense (1, N_pad) -> (N, 1)
    return out_t[0, :n].reshape(n, 1)


# ---------------------------------------------------------------------------
# Params + pure-JAX references
# ---------------------------------------------------------------------------
def init_params(key):
    """PyTorch-default-style init.  Linear weights stored as (in, out) (i.e.
    transposed vs. PyTorch).  BN params are randomized (not identity) so the
    folding path is genuinely exercised."""
    params = {}
    keys = iter(jax.random.split(key, 20))
    for i in range(len(LAYER_SIZES) - 1):
        fan_in, fan_out = LAYER_SIZES[i], LAYER_SIZES[i + 1]
        bound = 1.0 / math.sqrt(fan_in)
        li = i + 1
        params[f"w{li}"] = jax.random.uniform(
            next(keys), (fan_in, fan_out), jnp.float32, -bound, bound)
        params[f"b{li}"] = jax.random.uniform(
            next(keys), (fan_out,), jnp.float32, -bound, bound)
        if i < len(LAYER_SIZES) - 2:
            params[f"gamma{li}"] = jax.random.uniform(
                next(keys), (fan_out,), jnp.float32, 0.5, 1.5)
            params[f"beta{li}"] = 0.1 * jax.random.normal(next(keys), (fan_out,), jnp.float32)
            params[f"mean{li}"] = 0.1 * jax.random.normal(next(keys), (fan_out,), jnp.float32)
            params[f"var{li}"] = jax.random.uniform(
                next(keys), (fan_out,), jnp.float32, 0.5, 1.5)
    return params


def _gelu_ref(x):
    return 0.5 * x * (1.0 + jax.lax.erf(x * INV_SQRT2))


def _softplus_ref(x):
    return jnp.maximum(x, 0.0) + jnp.log1p(jnp.exp(-jnp.abs(x)))


def _dot_hi(a, b):
    return jnp.dot(a, b, precision=jax.lax.Precision.HIGHEST)


def reference_forward(x, params):
    """Pure-JAX reference with explicit (unfolded) eval-mode BatchNorm and
    exact erf-GELU (matches PyTorch's defaults)."""
    h = x
    for i in (1, 2, 3):
        z = _dot_hi(h, params[f"w{i}"]) + params[f"b{i}"]
        s = params[f"gamma{i}"] / jnp.sqrt(params[f"var{i}"] + BN_EPS)
        z = (z - params[f"mean{i}"]) * s + params[f"beta{i}"]
        h = _gelu_ref(z)
    z = _dot_hi(h, params["w4"]) + params["b4"]
    return _softplus_ref(z)


def reference_forward_folded(x, fused):
    """Pure-JAX reference using the folded params (validates fold_batchnorm)."""
    h = x
    for i in (1, 2, 3):
        h = _gelu_ref(_dot_hi(h, fused[f"w{i}"]) + fused[f"b{i}"])
    z = _dot_hi(h, fused["w4t"].T) + fused["b4"]
    return _softplus_ref(z)


if __name__ == "__main__":
    key = jax.random.PRNGKey(0)
    pkey, xkey1, xkey2 = jax.random.split(key, 3)
    params = init_params(pkey)

    # Small, tile-aligned-after-padding batch.
    batch = 8
    x = jax.random.normal(xkey1, (batch, LAYER_SIZES[0]), jnp.float32)
    out = jax.block_until_ready(custom_network_forward(x, params))
    ref = reference_forward(x, params)
    ref_folded = reference_forward_folded(x, fold_batchnorm(params))

    assert out.shape == (batch, 1), out.shape
    # BatchNorm folding is exact up to f32 rounding:
    assert jnp.allclose(ref_folded, ref, atol=1e-5, rtol=1e-5)
    # Pallas kernel vs. pure-JAX reference:
    assert jnp.allclose(out, ref, atol=2e-3, rtol=2e-3), (out, ref)

    # A second, non-multiple-of-128 batch to exercise the padding path.
    batch2 = 200
    x2 = jax.random.normal(xkey2, (batch2, LAYER_SIZES[0]), jnp.float32)
    out2 = jax.block_until_ready(custom_network_forward(x2, params))
    ref2 = reference_forward(x2, params)
    assert out2.shape == (batch2, 1), out2.shape
    assert jnp.allclose(out2, ref2, atol=2e-3, rtol=2e-3)

    print("KERNEL_OK")
</pallas_src>

<mosaic_0001>
module attributes {stable_mosaic.version = 11 : i64} {
  func.func @mlp_kernel(%arg0: i32, %arg1: memref<128x46xf32, #tpu.memory_space<vmem>>, %arg2: memref<46x128xf32, #tpu.memory_space<vmem>>, %arg3: memref<1x128xf32, #tpu.memory_space<vmem>>, %arg4: memref<128x128xf32, #tpu.memory_space<vmem>>, %arg5: memref<1x128xf32, #tpu.memory_space<vmem>>, %arg6: memref<128x128xf32, #tpu.memory_space<vmem>>, %arg7: memref<1x128xf32, #tpu.memory_space<vmem>>, %arg8: memref<1x128xf32, #tpu.memory_space<vmem>>, %arg9: memref<1x1xf32, #tpu.memory_space<vmem>>, %arg10: memref<1x128xf32, #tpu.memory_space<vmem>>) attributes {dimension_semantics = [#tpu.dimension_semantics<parallel>], iteration_bounds = array<i64: 1>, scalar_prefetch = 0 : i64, scratch_operands = 0 : i64, tpu.core_type = #tpu.core_type<tc>, window_params = [{transform_indices = @transform_0, window_bounds = array<i64: 128, 46>}, {pipeline_mode = #tpu.pipeline_mode<synchronous>, transform_indices = @transform_1, window_bounds = array<i64: 46, 128>}, {pipeline_mode = #tpu.pipeline_mode<synchronous>, transform_indices = @transform_2, window_bounds = array<i64: 1, 128>}, {pipeline_mode = #tpu.pipeline_mode<synchronous>, transform_indices = @transform_3, window_bounds = array<i64: 128, 128>}, {pipeline_mode = #tpu.pipeline_mode<synchronous>, transform_indices = @transform_4, window_bounds = array<i64: 1, 128>}, {pipeline_mode = #tpu.pipeline_mode<synchronous>, transform_indices = @transform_5, window_bounds = array<i64: 128, 128>}, {pipeline_mode = #tpu.pipeline_mode<synchronous>, transform_indices = @transform_6, window_bounds = array<i64: 1, 128>}, {pipeline_mode = #tpu.pipeline_mode<synchronous>, transform_indices = @transform_7, window_bounds = array<i64: 1, 128>}, {pipeline_mode = #tpu.pipeline_mode<synchronous>, transform_indices = @transform_8, window_bounds = array<i64: 1, 1>}, {transform_indices = @transform_9, window_bounds = array<i64: 1, 128>}]} {
    %c0 = arith.constant 0 : index
    %c0_0 = arith.constant 0 : index
    %0 = vector.load %arg1[%c0, %c0_0] : memref<128x46xf32, #tpu.memory_space<vmem>>, vector<128x46xf32>
    %c0_1 = arith.constant 0 : index
    %c0_2 = arith.constant 0 : index
    %1 = vector.load %arg2[%c0_1, %c0_2] : memref<46x128xf32, #tpu.memory_space<vmem>>, vector<46x128xf32>
    %cst = arith.constant dense<0.000000e+00> : vector<128x128xf32>
    %2 = tpu.matmul %0, %1, %cst {dimension_numbers = #tpu.dot_dimension_numbers<[1], [0], [0], [1], [0, 0, 1, 1], [], []>} : vector<128x46xf32>, vector<46x128xf32>, vector<128x128xf32> -> vector<128x128xf32>
    %c0_3 = arith.constant 0 : index
    %c0_4 = arith.constant 0 : index
    %3 = vector.load %arg3[%c0_3, %c0_4] : memref<1x128xf32, #tpu.memory_space<vmem>>, vector<1x128xf32>
    %4 = vector.broadcast %3 : vector<1x128xf32> to vector<128x128xf32>
    %5 = arith.addf %2, %4 : vector<128x128xf32>
    %cst_5 = arith.constant 5.000000e-01 : f32
    %6 = vector.broadcast %cst_5 : f32 to vector<128x128xf32>
    %7 = arith.mulf %6, %5 : vector<128x128xf32>
    %cst_6 = arith.constant 0.707106769 : f32
    %8 = vector.broadcast %cst_6 : f32 to vector<128x128xf32>
    %9 = arith.mulf %5, %8 : vector<128x128xf32>
    %10 = math.absf %9 : vector<128x128xf32>
    %cst_7 = arith.constant 0.327591091 : f32
    %11 = vector.broadcast %cst_7 : f32 to vector<128x128xf32>
    %12 = arith.mulf %11, %10 : vector<128x128xf32>
    %cst_8 = arith.constant 1.000000e+00 : f32
    %13 = vector.broadcast %cst_8 : f32 to vector<128x128xf32>
    %14 = arith.addf %13, %12 : vector<128x128xf32>
    %cst_9 = arith.constant 1.000000e+00 : f32
    %15 = vector.broadcast %cst_9 : f32 to vector<128x128xf32>
    %16 = arith.divf %15, %14 : vector<128x128xf32>
    %cst_10 = arith.constant 1.06140542 : f32
    %17 = vector.broadcast %cst_10 : f32 to vector<128x128xf32>
    %18 = arith.mulf %16, %17 : vector<128x128xf32>
    %cst_11 = arith.constant -1.45315206 : f32
    %19 = vector.broadcast %cst_11 : f32 to vector<128x128xf32>
    %20 = arith.addf %19, %18 : vector<128x128xf32>
    %21 = arith.mulf %16, %20 : vector<128x128xf32>
    %cst_12 = arith.constant 1.42141378 : f32
    %22 = vector.broadcast %cst_12 : f32 to vector<128x128xf32>
    %23 = arith.addf %22, %21 : vector<128x128xf32>
    %24 = arith.mulf %16, %23 : vector<128x128xf32>
    %cst_13 = arith.constant -0.284496725 : f32
    %25 = vector.broadcast %cst_13 : f32 to vector<128x128xf32>
    %26 = arith.addf %25, %24 : vector<128x128xf32>
    %27 = arith.mulf %16, %26 : vector<128x128xf32>
    %cst_14 = arith.constant 0.254829586 : f32
    %28 = vector.broadcast %cst_14 : f32 to vector<128x128xf32>
    %29 = arith.addf %28, %27 : vector<128x128xf32>
    %30 = arith.mulf %16, %29 : vector<128x128xf32>
    %cst_15 = arith.constant 0.000000e+00 : f32
    %31 = vector.broadcast %cst_15 : f32 to vector<128x128xf32>
    %32 = arith.subf %31, %10 : vector<128x128xf32>
    %33 = arith.mulf %32, %10 : vector<128x128xf32>
    %34 = math.exp %33 : vector<128x128xf32>
    %35 = arith.mulf %30, %34 : vector<128x128xf32>
    %cst_16 = arith.constant 1.000000e+00 : f32
    %36 = vector.broadcast %cst_16 : f32 to vector<128x128xf32>
    %37 = arith.subf %36, %35 : vector<128x128xf32>
    %cst_17 = arith.constant 0.000000e+00 : f32
    %38 = vector.broadcast %cst_17 : f32 to vector<128x128xf32>
    %39 = arith.cmpf oge, %9, %38 : vector<128x128xf32>
    %cst_18 = arith.constant 0.000000e+00 : f32
    %40 = vector.broadcast %cst_18 : f32 to vector<128x128xf32>
    %41 = arith.subf %40, %37 : vector<128x128xf32>
    %42 = arith.select %39, %37, %41 : vector<128x128xi1>, vector<128x128xf32>
    %cst_19 = arith.constant 1.000000e+00 : f32
    %43 = vector.broadcast %cst_19 : f32 to vector<128x128xf32>
    %44 = arith.addf %43, %42 : vector<128x128xf32>
    %45 = arith.mulf %7, %44 : vector<128x128xf32>
    %c0_20 = arith.constant 0 : index
    %c0_21 = arith.constant 0 : index
    %46 = vector.load %arg4[%c0_20, %c0_21] : memref<128x128xf32, #tpu.memory_space<vmem>>, vector<128x128xf32>
    %cst_22 = arith.constant dense<0.000000e+00> : vector<128x128xf32>
    %47 = tpu.matmul %45, %46, %cst_22 {dimension_numbers = #tpu.dot_dimension_numbers<[1], [0], [0], [1], [0, 0, 1, 1], [], []>} : vector<128x128xf32>, vector<128x128xf32>, vector<128x128xf32> -> vector<128x128xf32>
    %c0_23 = arith.constant 0 : index
    %c0_24 = arith.constant 0 : index
    %48 = vector.load %arg5[%c0_23, %c0_24] : memref<1x128xf32, #tpu.memory_space<vmem>>, vector<1x128xf32>
    %49 = vector.broadcast %48 : vector<1x128xf32> to vector<128x128xf32>
    %50 = arith.addf %47, %49 : vector<128x128xf32>
    %cst_25 = arith.constant 5.000000e-01 : f32
    %51 = vector.broadcast %cst_25 : f32 to vector<128x128xf32>
    %52 = arith.mulf %51, %50 : vector<128x128xf32>
    %cst_26 = arith.constant 0.707106769 : f32
    %53 = vector.broadcast %cst_26 : f32 to vector<128x128xf32>
    %54 = arith.mulf %50, %53 : vector<128x128xf32>
    %55 = math.absf %54 : vector<128x128xf32>
    %cst_27 = arith.constant 0.327591091 : f32
    %56 = vector.broadcast %cst_27 : f32 to vector<128x128xf32>
    %57 = arith.mulf %56, %55 : vector<128x128xf32>
    %cst_28 = arith.constant 1.000000e+00 : f32
    %58 = vector.broadcast %cst_28 : f32 to vector<128x128xf32>
    %59 = arith.addf %58, %57 : vector<128x128xf32>
    %cst_29 = arith.constant 1.000000e+00 : f32
    %60 = vector.broadcast %cst_29 : f32 to vector<128x128xf32>
    %61 = arith.divf %60, %59 : vector<128x128xf32>
    %cst_30 = arith.constant 1.06140542 : f32
    %62 = vector.broadcast %cst_30 : f32 to vector<128x128xf32>
    %63 = arith.mulf %61, %62 : vector<128x128xf32>
    %cst_31 = arith.constant -1.45315206 : f32
    %64 = vector.broadcast %cst_31 : f32 to vector<128x128xf32>
    %65 = arith.addf %64, %63 : vector<128x128xf32>
    %66 = arith.mulf %61, %65 : vector<128x128xf32>
    %cst_32 = arith.constant 1.42141378 : f32
    %67 = vector.broadcast %cst_32 : f32 to vector<128x128xf32>
    %68 = arith.addf %67, %66 : vector<128x128xf32>
    %69 = arith.mulf %61, %68 : vector<128x128xf32>
    %cst_33 = arith.constant -0.284496725 : f32
    %70 = vector.broadcast %cst_33 : f32 to vector<128x128xf32>
    %71 = arith.addf %70, %69 : vector<128x128xf32>
    %72 = arith.mulf %61, %71 : vector<128x128xf32>
    %cst_34 = arith.constant 0.254829586 : f32
    %73 = vector.broadcast %cst_34 : f32 to vector<128x128xf32>
    %74 = arith.addf %73, %72 : vector<128x128xf32>
    %75 = arith.mulf %61, %74 : vector<128x128xf32>
    %cst_35 = arith.constant 0.000000e+00 : f32
    %76 = vector.broadcast %cst_35 : f32 to vector<128x128xf32>
    %77 = arith.subf %76, %55 : vector<128x128xf32>
    %78 = arith.mulf %77, %55 : vector<128x128xf32>
    %79 = math.exp %78 : vector<128x128xf32>
    %80 = arith.mulf %75, %79 : vector<128x128xf32>
    %cst_36 = arith.constant 1.000000e+00 : f32
    %81 = vector.broadcast %cst_36 : f32 to vector<128x128xf32>
    %82 = arith.subf %81, %80 : vector<128x128xf32>
    %cst_37 = arith.constant 0.000000e+00 : f32
    %83 = vector.broadcast %cst_37 : f32 to vector<128x128xf32>
    %84 = arith.cmpf oge, %54, %83 : vector<128x128xf32>
    %cst_38 = arith.constant 0.000000e+00 : f32
    %85 = vector.broadcast %cst_38 : f32 to vector<128x128xf32>
    %86 = arith.subf %85, %82 : vector<128x128xf32>
    %87 = arith.select %84, %82, %86 : vector<128x128xi1>, vector<128x128xf32>
    %cst_39 = arith.constant 1.000000e+00 : f32
    %88 = vector.broadcast %cst_39 : f32 to vector<128x128xf32>
    %89 = arith.addf %88, %87 : vector<128x128xf32>
    %90 = arith.mulf %52, %89 : vector<128x128xf32>
    %c0_40 = arith.constant 0 : index
    %c0_41 = arith.constant 0 : index
    %91 = vector.load %arg6[%c0_40, %c0_41] : memref<128x128xf32, #tpu.memory_space<vmem>>, vector<128x128xf32>
    %cst_42 = arith.constant dense<0.000000e+00> : vector<128x128xf32>
    %92 = tpu.matmul %90, %91, %cst_42 {dimension_numbers = #tpu.dot_dimension_numbers<[1], [0], [0], [1], [0, 0, 1, 1], [], []>} : vector<128x128xf32>, vector<128x128xf32>, vector<128x128xf32> -> vector<128x128xf32>
    %c0_43 = arith.constant 0 : index
    %c0_44 = arith.constant 0 : index
    %93 = vector.load %arg7[%c0_43, %c0_44] : memref<1x128xf32, #tpu.memory_space<vmem>>, vector<1x128xf32>
    %94 = vector.broadcast %93 : vector<1x128xf32> to vector<128x128xf32>
    %95 = arith.addf %92, %94 : vector<128x128xf32>
    %cst_45 = arith.constant 5.000000e-01 : f32
    %96 = vector.broadcast %cst_45 : f32 to vector<128x128xf32>
    %97 = arith.mulf %96, %95 : vector<128x128xf32>
    %cst_46 = arith.constant 0.707106769 : f32
    %98 = vector.broadcast %cst_46 : f32 to vector<128x128xf32>
    %99 = arith.mulf %95, %98 : vector<128x128xf32>
    %100 = math.absf %99 : vector<128x128xf32>
    %cst_47 = arith.constant 0.327591091 : f32
    %101 = vector.broadcast %cst_47 : f32 to vector<128x128xf32>
    %102 = arith.mulf %101, %100 : vector<128x128xf32>
    %cst_48 = arith.constant 1.000000e+00 : f32
    %103 = vector.broadcast %cst_48 : f32 to vector<128x128xf32>
    %104 = arith.addf %103, %102 : vector<128x128xf32>
    %cst_49 = arith.constant 1.000000e+00 : f32
    %105 = vector.broadcast %cst_49 : f32 to vector<128x128xf32>
    %106 = arith.divf %105, %104 : vector<128x128xf32>
    %cst_50 = arith.constant 1.06140542 : f32
    %107 = vector.broadcast %cst_50 : f32 to vector<128x128xf32>
    %108 = arith.mulf %106, %107 : vector<128x128xf32>
    %cst_51 = arith.constant -1.45315206 : f32
    %109 = vector.broadcast %cst_51 : f32 to vector<128x128xf32>
    %110 = arith.addf %109, %108 : vector<128x128xf32>
    %111 = arith.mulf %106, %110 : vector<128x128xf32>
    %cst_52 = arith.constant 1.42141378 : f32
    %112 = vector.broadcast %cst_52 : f32 to vector<128x128xf32>
    %113 = arith.addf %112, %111 : vector<128x128xf32>
    %114 = arith.mulf %106, %113 : vector<128x128xf32>
    %cst_53 = arith.constant -0.284496725 : f32
    %115 = vector.broadcast %cst_53 : f32 to vector<128x128xf32>
    %116 = arith.addf %115, %114 : vector<128x128xf32>
    %117 = arith.mulf %106, %116 : vector<128x128xf32>
    %cst_54 = arith.constant 0.254829586 : f32
    %118 = vector.broadcast %cst_54 : f32 to vector<128x128xf32>
    %119 = arith.addf %118, %117 : vector<128x128xf32>
    %120 = arith.mulf %106, %119 : vector<128x128xf32>
    %cst_55 = arith.constant 0.000000e+00 : f32
    %121 = vector.broadcast %cst_55 : f32 to vector<128x128xf32>
    %122 = arith.subf %121, %100 : vector<128x128xf32>
    %123 = arith.mulf %122, %100 : vector<128x128xf32>
    %124 = math.exp %123 : vector<128x128xf32>
    %125 = arith.mulf %120, %124 : vector<128x128xf32>
    %cst_56 = arith.constant 1.000000e+00 : f32
    %126 = vector.broadcast %cst_56 : f32 to vector<128x128xf32>
    %127 = arith.subf %126, %125 : vector<128x128xf32>
    %cst_57 = arith.constant 0.000000e+00 : f32
    %128 = vector.broadcast %cst_57 : f32 to vector<128x128xf32>
    %129 = arith.cmpf oge, %99, %128 : vector<128x128xf32>
    %cst_58 = arith.constant 0.000000e+00 : f32
    %130 = vector.broadcast %cst_58 : f32 to vector<128x128xf32>
    %131 = arith.subf %130, %127 : vector<128x128xf32>
    %132 = arith.select %129, %127, %131 : vector<128x128xi1>, vector<128x128xf32>
    %cst_59 = arith.constant 1.000000e+00 : f32
    %133 = vector.broadcast %cst_59 : f32 to vector<128x128xf32>
    %134 = arith.addf %133, %132 : vector<128x128xf32>
    %135 = arith.mulf %97, %134 : vector<128x128xf32>
    %c0_60 = arith.constant 0 : index
    %c0_61 = arith.constant 0 : index
    %136 = vector.load %arg8[%c0_60, %c0_61] : memref<1x128xf32, #tpu.memory_space<vmem>>, vector<1x128xf32>
    %137 = tpu.transpose %135, [1, 0] : vector<128x128xf32> -> vector<128x128xf32>
    %cst_62 = arith.constant dense<0.000000e+00> : vector<1x128xf32>
    %138 = tpu.matmul %136, %137, %cst_62 {dimension_numbers = #tpu.dot_dimension_numbers<[1], [0], [0], [1], [0, 0, 1, 1], [], []>} : vector<1x128xf32>, vector<128x128xf32>, vector<1x128xf32> -> vector<1x128xf32>
    %c0_63 = arith.constant 0 : index
    %c0_64 = arith.constant 0 : index
    %139 = vector.load %arg9[%c0_63, %c0_64] : memref<1x1xf32, #tpu.memory_space<vmem>>, vector<1x1xf32>
    %140 = vector.broadcast %139 : vector<1x1xf32> to vector<1x128xf32>
    %141 = arith.addf %138, %140 : vector<1x128xf32>
    %cst_65 = arith.constant 0.000000e+00 : f32
    %142 = vector.broadcast %cst_65 : f32 to vector<1x128xf32>
    %143 = arith.maximumf %141, %142 : vector<1x128xf32>
    %144 = math.absf %141 : vector<1x128xf32>
    %cst_66 = arith.constant 0.000000e+00 : f32
    %145 = vector.broadcast %cst_66 : f32 to vector<1x128xf32>
    %146 = arith.subf %145, %144 : vector<1x128xf32>
    %147 = math.exp %146 : vector<1x128xf32>
    %cst_67 = arith.constant 1.000000e+00 : f32
    %148 = vector.broadcast %cst_67 : f32 to vector<1x128xf32>
    %149 = arith.addf %148, %147 : vector<1x128xf32>
    %150 = math.log %149 : vector<1x128xf32>
    %151 = arith.addf %143, %150 : vector<1x128xf32>
    %c0_68 = arith.constant 0 : index
    %c0_69 = arith.constant 0 : index
    %152 = vector.load %arg10[%c0_68, %c0_69] : memref<1x128xf32, #tpu.memory_space<vmem>>, vector<1x128xf32>
    tpu.vector_store %arg10[%c0_68, %c0_69], %151 {strides = array<i32>} : memref<1x128xf32, #tpu.memory_space<vmem>>, vector<1x128xf32>,
    return
  }
  func.func @transform_0(%arg0: i32) -> (i32, i32) {
    %c0_i32 = arith.constant 0 : i32
    %c0_i32_0 = arith.constant 0 : i32
    return %arg0, %c0_i32 : i32, i32
  }
  func.func @transform_1(%arg0: i32) -> (i32, i32) {
    %c0_i32 = arith.constant 0 : i32
    %c0_i32_0 = arith.constant 0 : i32
    %c0_i32_1 = arith.constant 0 : i32
    return %c0_i32, %c0_i32_0 : i32, i32
  }
  func.func @transform_2(%arg0: i32) -> (i32, i32) {
    %c0_i32 = arith.constant 0 : i32
    %c0_i32_0 = arith.constant 0 : i32
    %c0_i32_1 = arith.constant 0 : i32
    return %c0_i32, %c0_i32_0 : i32, i32
  }
  func.func @transform_3(%arg0: i32) -> (i32, i32) {
    %c0_i32 = arith.constant 0 : i32
    %c0_i32_0 = arith.constant 0 : i32
    %c0_i32_1 = arith.constant 0 : i32
    return %c0_i32, %c0_i32_0 : i32, i32
  }
  func.func @transform_4(%arg0: i32) -> (i32, i32) {
    %c0_i32 = arith.constant 0 : i32
    %c0_i32_0 = arith.constant 0 : i32
    %c0_i32_1 = arith.constant 0 : i32
    return %c0_i32, %c0_i32_0 : i32, i32
  }
  func.func @transform_5(%arg0: i32) -> (i32, i32) {
    %c0_i32 = arith.constant 0 : i32
    %c0_i32_0 = arith.constant 0 : i32
    %c0_i32_1 = arith.constant 0 : i32
    return %c0_i32, %c0_i32_0 : i32, i32
  }
  func.func @transform_6(%arg0: i32) -> (i32, i32) {
    %c0_i32 = arith.constant 0 : i32
    %c0_i32_0 = arith.constant 0 : i32
    %c0_i32_1 = arith.constant 0 : i32
    return %c0_i32, %c0_i32_0 : i32, i32
  }
  func.func @transform_7(%arg0: i32) -> (i32, i32) {
    %c0_i32 = arith.constant 0 : i32
    %c0_i32_0 = arith.constant 0 : i32
    %c0_i32_1 = arith.constant 0 : i32
    return %c0_i32, %c0_i32_0 : i32, i32
  }
  func.func @transform_8(%arg0: i32) -> (i32, i32) {
    %c0_i32 = arith.constant 0 : i32
    %c0_i32_0 = arith.constant 0 : i32
    %c0_i32_1 = arith.constant 0 : i32
    return %c0_i32, %c0_i32_0 : i32, i32
  }
  func.func @transform_9(%arg0: i32) -> (i32, i32) {
    %c0_i32 = arith.constant 0 : i32
    %c0_i32_0 = arith.constant 0 : i32
    return %c0_i32, %arg0 : i32, i32
  }
}

</mosaic_0001>

<llo_original>
// kernel: tpu_custom_call.1
$region0: #{tpu_custom_call.1}
  #allocation0 [shape = 'u32[]', space=smem, size = 0x4, offset = 0x4, fixed_abs, tag = 'smem constant byte address 0x4 - core index']
  #allocation1 [shape = 'u32[72,128]{1,0:T(1,128)}', space=vmem, size = 0x9000, scoped, tag = 'internal scratch']
  #allocation2 [shape = 'f32[1,1]{1,0:T(1,128)S(1)}', space=vmem, size = 0x200, scoped, tag = 'scoped memory for tpu_custom_call.1']
  %s0 = inlined_call_operand.vmem [shape: f32[128,46], index: 0, kind: input, shape index: {}]
  %s1 = inlined_call_operand.vmem [shape: f32[46,128], index: 1, kind: input, shape index: {}]
  %s2 = inlined_call_operand.vmem [shape: f32[1,128], index: 2, kind: input, shape index: {}]
  %s3 = inlined_call_operand.vmem [shape: f32[128,128], index: 3, kind: input, shape index: {}]
  %s4 = inlined_call_operand.vmem [shape: f32[1,128], index: 4, kind: input, shape index: {}]
  %s5 = inlined_call_operand.hbm [shape: f32[128,128], index: 5, kind: input, shape index: {}]
  %s6 = inlined_call_operand.vmem [shape: f32[1,128], index: 6, kind: input, shape index: {}]
  %s7 = inlined_call_operand.vmem [shape: f32[1,128], index: 7, kind: input, shape index: {}]
  %s8 = inlined_call_operand.<no memory space> [shape: f32[1,1], index: 8, kind: input, shape index: {}]
  %s9 = inlined_call_operand.hbm [shape: f32[1,128], index: 9, kind: output, shape index: {}]
  %s10 = sld [smem:[#allocation0]]
  $region50: #{tpu_custom_call.1} parent=0
    _
  %s12 = ssub.s32 1, %s10
  %s13 = scalar_select 0, %s12, %s10
  %v14 = vstv %s8
  %15 = vst [vmem:[#allocation2] sm:$0x1] %v14
  $region1: #{tpu_custom_call.1} parent=0
    #allocation3 [shape = 'u8[65536]{0}', space=vmem, size = 0x10000, scoped, tag = 'input window, operand 5, single buffered']
    #allocation4 [shape = 's32[1]{0}', space=sflag, size = 0x4, scoped, tag = 'scoped memory for tpu_custom_call.1']
    #allocation5 [shape = 's32[1]{0}', space=sflag, size = 0x4, scoped, tag = 'scoped memory for tpu_custom_call.1']
    #allocation6 [shape = 'u8[512]{0}', space=vmem, size = 0x400, scoped, tag = 'output window, operand 0, single buffered']
    %16 = vsyncpa [#allocation4], 0
    %17 = vsyncpa [#allocation5], 0
    // Predicated region
    $region2: #{tpu_custom_call.1} parent=1 // pred_check
      _
    $region3: #{tpu_custom_call.1} parent=1 // pred_check_branch
      %19 = sbr.rel (0) target = $region5
    $region4: #{tpu_custom_call.1} parent=1 // pred_region
      _
    $region5: #{tpu_custom_call.1} parent=1 // pred_fallthru
      _
    // Predicated region
    $region6: #{tpu_custom_call.1} parent=1 // pred_check
      _
    $region7: #{tpu_custom_call.1} parent=1 // pred_check_branch
      %21 = sbr.rel (0) target = $region9
    $region8: #{tpu_custom_call.1} parent=1 // pred_region
      _
    $region9: #{tpu_custom_call.1} parent=1 // pred_fallthru
      _
    // Predicated region
    $region10: #{tpu_custom_call.1} parent=1 // pred_check
      _
    $region11: #{tpu_custom_call.1} parent=1 // pred_check_branch
      %23 = sbr.rel (0) target = $region13
    $region12: #{tpu_custom_call.1} parent=1 // pred_region
      _
    $region13: #{tpu_custom_call.1} parent=1 // pred_fallthru
      _
    // Predicated region
    $region14: #{tpu_custom_call.1} parent=1 // pred_check
      _
    $region15: #{tpu_custom_call.1} parent=1 // pred_check_branch
      %25 = sbr.rel (0) target = $region17
    $region16: #{tpu_custom_call.1} parent=1 // pred_region
      _
    $region17: #{tpu_custom_call.1} parent=1 // pred_fallthru
      _
    // Predicated region
    $region18: #{tpu_custom_call.1} parent=1 // pred_check
      _
    $region19: #{tpu_custom_call.1} parent=1 // pred_check_branch
      %27 = sbr.rel (0) target = $region21
    $region20: #{tpu_custom_call.1} parent=1 // pred_region
      _
    $region21: #{tpu_custom_call.1} parent=1 // pred_fallthru
      _
    // Predicated region
    $region22: #{tpu_custom_call.1} parent=1 // pred_check
      _
    $region23: #{tpu_custom_call.1} parent=1 // pred_check_branch
      %29 = sbr.rel (0) target = $region25
    $region24: #{tpu_custom_call.1} parent=1 // pred_region
      %31 = vsyncadd [#allocation4], 0
      %s32 = sshll.u32 %s5, 4
      %s33 = int_to_ptr.hbm [resolvable:$true] %s32
      %s34 = sshll.u32 [#allocation3], 4
      %s35 = int_to_ptr.vmem [resolvable:$true] %s34
      %40 = dma.hbm_to_vmem [thread:$0]  %s33, 2048, %s35, [#allocation4], 128, 128, 8
    $region25: #{tpu_custom_call.1} parent=1 // pred_fallthru
      _
    // Predicated region
    $region26: #{tpu_custom_call.1} parent=1 // pred_check
      _
    $region27: #{tpu_custom_call.1} parent=1 // pred_check_branch
      %42 = sbr.rel (0) target = $region29
    $region28: #{tpu_custom_call.1} parent=1 // pred_region
      _
    $region29: #{tpu_custom_call.1} parent=1 // pred_fallthru
      _
    // Predicated region
    $region30: #{tpu_custom_call.1} parent=1 // pred_check
      _
    $region31: #{tpu_custom_call.1} parent=1 // pred_check_branch
      %44 = sbr.rel (0) target = $region33
    $region32: #{tpu_custom_call.1} parent=1 // pred_region
      _
    $region33: #{tpu_custom_call.1} parent=1 // pred_fallthru
      _
    // Predicated region
    $region34: #{tpu_custom_call.1} parent=1 // pred_check
      _
    $region35: #{tpu_custom_call.1} parent=1 // pred_check_branch
      %46 = sbr.rel (0) target = $region37
    $region36: #{tpu_custom_call.1} parent=1 // pred_region
      _
    $region37: #{tpu_custom_call.1} parent=1 // pred_fallthru
      _
    // Predicated region
    $region38: #{tpu_custom_call.1} parent=1 // pred_check
      _
    $region39: #{tpu_custom_call.1} parent=1 // pred_check_branch
      %48 = sbr.rel (0) target = $region41
    $region40: #{tpu_custom_call.1} parent=1 // pred_region
      %50 = dma.done [#allocation4], 2048
    $region41: #{tpu_custom_call.1} parent=1 // pred_fallthru
      _
    %v51 = vld [vmem:[%s0] sm:$0xff]
    %v52 = vld [vmem:[%s0 + $0x8] sm:$0xff]
    %v53 = vld [vmem:[%s0 + $0x10] sm:$0xff]
    %v54 = vld [vmem:[%s0 + $0x18] sm:$0xff]
    %v55 = vld [vmem:[%s0 + $0x20] sm:$0xff]
    %v56 = vld [vmem:[%s0 + $0x28] sm:$0xff]
    %v57 = vld [vmem:[%s0 + $0x30] sm:$0xff]
    %v58 = vld [vmem:[%s0 + $0x38] sm:$0xff]
    %v59 = vld [vmem:[%s0 + $0x40] sm:$0xff]
    %v60 = vld [vmem:[%s0 + $0x48] sm:$0xff]
    %v61 = vld [vmem:[%s0 + $0x50] sm:$0xff]
    %v62 = vld [vmem:[%s0 + $0x58] sm:$0xff]
    %v63 = vld [vmem:[%s0 + $0x60] sm:$0xff]
    %v64 = vld [vmem:[%s0 + $0x68] sm:$0xff]
    %v65 = vld [vmem:[%s0 + $0x70] sm:$0xff]
    %v66 = vld [vmem:[%s0 + $0x78] sm:$0xff]
    %v67 = vld [vmem:[%s1] sm:$0xff]
    %v68 = vld [vmem:[%s1 + $0x8] sm:$0xff]
    %v69 = vld [vmem:[%s1 + $0x10] sm:$0xff]
    %v70 = vld [vmem:[%s1 + $0x18] sm:$0xff]
    %v71 = vld [vmem:[%s1 + $0x20] sm:$0xff]
    %v72 = vld [vmem:[%s1 + $0x28] sm:$0x3f]
    %v73 = vld [vmem:[%s2] sm:$0x1]
    %v75 = vperm.slane %v73, 0
    %vm77 = vcmask 375808
    %v79 = vsel %vm77, %v51, 0
    %v82 = vsel %vm77, %v52, 0
    %v85 = vsel %vm77, %v53, 0
    %v88 = vsel %vm77, %v54, 0
    %v91 = vsel %vm77, %v55, 0
    %v94 = vsel %vm77, %v56, 0
    %v97 = vsel %vm77, %v57, 0
    %v100 = vsel %vm77, %v58, 0
    %v103 = vsel %vm77, %v59, 0
    %v106 = vsel %vm77, %v60, 0
    %v109 = vsel %vm77, %v61, 0
    %v112 = vsel %vm77, %v62, 0
    %v115 = vsel %vm77, %v63, 0
    %v118 = vsel %vm77, %v64, 0
    %v121 = vsel %vm77, %v65, 0
    %v124 = vsel %vm77, %v66, 0
    %vm126 = vcmask 1045504
    %v128 = vsel %vm126, %v72, 0
    %130 = vmatpush.msra.mxu0 0.0
    %131 = vmatpush.msra.mxu0 0.0
    %132 = vmatpush.msra.mxu0 0.0
    %133 = vmatpush.msra.mxu0 0.0
    %134 = vmatpush.msra.mxu0 0.0
    %135 = vmatpush.msra.mxu0 0.0
    %136 = vmatpush.msra.mxu0 0.0
    %137 = vmatpush.msra.mxu0 0.0
    %138 = vmatpush.msra.mxu0 0.0
    %139 = vmatpush.msra.mxu0 0.0
    %140 = vmatpush.msra.mxu0 %v128
    %141 = vmatpush.msra.mxu0 %v71
    %142 = vmatpush.msra.mxu0 %v70
    %143 = vmatpush.msra.mxu0 %v69
    %144 = vmatpush.msra.mxu0 %v68
    %145 = vmatpush.msra.mxu0 %v67
    %146 = vmatmul.f32.gmra.mxu0 %v79
    %v147 = vpop.f32.mrf.mxu0
    %v148 = vadd.f32 %v75, %v147
    %149 = vmatmul.f32.gmra.mxu0 %v82
    %v150 = vpop.f32.mrf.mxu0
    %v151 = vadd.f32 %v75, %v150
    %152 = vmatmul.f32.gmra.mxu0 %v85
    %v153 = vpop.f32.mrf.mxu0
    %v154 = vadd.f32 %v75, %v153
    %155 = vmatmul.f32.gmra.mxu0 %v88
    %v156 = vpop.f32.mrf.mxu0
    %v157 = vadd.f32 %v75, %v156
    %158 = vmatmul.f32.gmra.mxu0 %v91
    %v159 = vpop.f32.mrf.mxu0
    %v160 = vadd.f32 %v75, %v159
    %161 = vmatmul.f32.gmra.mxu0 %v94
    %v162 = vpop.f32.mrf.mxu0
    %v163 = vadd.f32 %v75, %v162
    %164 = vmatmul.f32.gmra.mxu0 %v97
    %v165 = vpop.f32.mrf.mxu0
    %v166 = vadd.f32 %v75, %v165
    %167 = vmatmul.f32.gmra.mxu0 %v100
    %v168 = vpop.f32.mrf.mxu0
    %v169 = vadd.f32 %v75, %v168
    %170 = vmatmul.f32.gmra.mxu0 %v103
    %v171 = vpop.f32.mrf.mxu0
    %v172 = vadd.f32 %v75, %v171
    %173 = vmatmul.f32.gmra.mxu0 %v106
    %v174 = vpop.f32.mrf.mxu0
    %v175 = vadd.f32 %v75, %v174
    %176 = vmatmul.f32.gmra.mxu0 %v109
    %v177 = vpop.f32.mrf.mxu0
    %v178 = vadd.f32 %v75, %v177
    %179 = vmatmul.f32.gmra.mxu0 %v112
    %v180 = vpop.f32.mrf.mxu0
    %v181 = vadd.f32 %v75, %v180
    %182 = vmatmul.f32.gmra.mxu0 %v115
    %v183 = vpop.f32.mrf.mxu0
    %v184 = vadd.f32 %v75, %v183
    %185 = vmatmul.f32.gmra.mxu0 %v118
    %v186 = vpop.f32.mrf.mxu0
    %v187 = vadd.f32 %v75, %v186
    %188 = vmatmul.f32.gmra.mxu0 %v121
    %v189 = vpop.f32.mrf.mxu0
    %v190 = vadd.f32 %v75, %v189
    %191 = vmatmul.f32.gmra.mxu0 %v124
    %v192 = vpop.f32.mrf.mxu0
    %v193 = vadd.f32 %v75, %v192
    %194 = vdwg.mxu0
    %v195 = vmul.f32 %v148, 0.5
    %v196 = vmul.f32 %v151, 0.5
    %v197 = vmul.f32 %v154, 0.5
    %v198 = vmul.f32 %v157, 0.5
    %v199 = vmul.f32 %v160, 0.5
    %v200 = vmul.f32 %v163, 0.5
    %v201 = vmul.f32 %v166, 0.5
    %v202 = vmul.f32 %v169, 0.5
    %v203 = vmul.f32 %v172, 0.5
    %v204 = vmul.f32 %v175, 0.5
    %v205 = vmul.f32 %v178, 0.5
    %v206 = vmul.f32 %v181, 0.5
    %v207 = vmul.f32 %v184, 0.5
    %v208 = vmul.f32 %v187, 0.5
    %v209 = vmul.f32 %v190, 0.5
    %v210 = vmul.f32 %v193, 0.5
    %v211 = vmul.f32 %v148, 0.70710677
    %v212 = vmul.f32 %v151, 0.70710677
    %v213 = vmul.f32 %v154, 0.70710677
    %v214 = vmul.f32 %v157, 0.70710677
    %v215 = vmul.f32 %v160, 0.70710677
    %v216 = vmul.f32 %v163, 0.70710677
    %v217 = vmul.f32 %v166, 0.70710677
    %v218 = vmul.f32 %v169, 0.70710677
    %v219 = vmul.f32 %v172, 0.70710677
    %v220 = vmul.f32 %v175, 0.70710677
    %v221 = vmul.f32 %v178, 0.70710677
    %v222 = vmul.f32 %v181, 0.70710677
    %v223 = vmul.f32 %v184, 0.70710677
    %v224 = vmul.f32 %v187, 0.70710677
    %v225 = vmul.f32 %v190, 0.70710677
    %v226 = vmul.f32 %v193, 0.70710677
    %v227 = vand.u32 2147483647, %v211
    %v228 = vand.u32 2147483647, %v212
    %v229 = vand.u32 2147483647, %v213
    %v230 = vand.u32 2147483647, %v214
    %v231 = vand.u32 2147483647, %v215
    %v232 = vand.u32 2147483647, %v216
    %v233 = vand.u32 2147483647, %v217
    %v234 = vand.u32 2147483647, %v218
    %v235 = vand.u32 2147483647, %v219
    %v236 = vand.u32 2147483647, %v220
    %v237 = vand.u32 2147483647, %v221
    %v238 = vand.u32 2147483647, %v222
    %v239 = vand.u32 2147483647, %v223
    %v240 = vand.u32 2147483647, %v224
    %v241 = vand.u32 2147483647, %v225
    %v242 = vand.u32 2147483647, %v226
    %v243 = vmul.f32 %v227, 0.3275911
    %v244 = vmul.f32 %v228, 0.3275911
    %v245 = vmul.f32 %v229, 0.3275911
    %v246 = vmul.f32 %v230, 0.3275911
    %v247 = vmul.f32 %v231, 0.3275911
    %v248 = vmul.f32 %v232, 0.3275911
    %v249 = vmul.f32 %v233, 0.3275911
    %v250 = vmul.f32 %v234, 0.3275911
    %v251 = vmul.f32 %v235, 0.3275911
    %v252 = vmul.f32 %v236, 0.3275911
    %v253 = vmul.f32 %v237, 0.3275911
    %v254 = vmul.f32 %v238, 0.3275911
    %v255 = vmul.f32 %v239, 0.3275911
    %v256 = vmul.f32 %v240, 0.3275911
    %v257 = vmul.f32 %v241, 0.3275911
    %v258 = vmul.f32 %v242, 0.3275911
    %v259 = vadd.f32 %v243, 1.0
    %v260 = vadd.f32 %v244, 1.0
    %v261 = vadd.f32 %v245, 1.0
    %v262 = vadd.f32 %v246, 1.0
    %v263 = vadd.f32 %v247, 1.0
    %v264 = vadd.f32 %v248, 1.0
    %v265 = vadd.f32 %v249, 1.0
    %v266 = vadd.f32 %v250, 1.0
    %v267 = vadd.f32 %v251, 1.0
    %v268 = vadd.f32 %v252, 1.0
    %v269 = vadd.f32 %v253, 1.0
    %v270 = vadd.f32 %v254, 1.0
    %v271 = vadd.f32 %v255, 1.0
    %v272 = vadd.f32 %v256, 1.0
    %v273 = vadd.f32 %v257, 1.0
    %v274 = vadd.f32 %v258, 1.0
    %v275 = vrcp.pop %v259
    %v276 = vmul.f32 %v259, %v275
    %v277 = vsub.f32 1.0, %v276
    %v278 = vmul.f32 %v275, %v277
    %v279 = vadd.f32 %v275, %v278
    %vm280 = vweird.f32 %v259
    %vm281 = vweird.f32 %v275
    %vm282 = vmor %vm280, %vm281
    %v283 = vsel %vm282, %v275, %v279
    %v284 = vand.u32 2147483647, %v259
    %vm285 = vcmp.eq.f32.partialorder %v284, 8.507059e+37
    %v286 = vand.u32 %v259, 2147483648
    %v287 = vor.u32 1.1754944e-38, %v286
    %v288 = vsel %vm285, %v287, %v283
    %v289 = vmul.f32 1.0, %v288
    %v290 = vrcp.pop %v260
    %v291 = vmul.f32 %v260, %v290
    %v292 = vsub.f32 1.0, %v291
    %v293 = vmul.f32 %v290, %v292
    %v294 = vadd.f32 %v290, %v293
    %vm295 = vweird.f32 %v260
    %vm296 = vweird.f32 %v290
    %vm297 = vmor %vm295, %vm296
    %v298 = vsel %vm297, %v290, %v294
    %v299 = vand.u32 2147483647, %v260
    %vm300 = vcmp.eq.f32.partialorder %v299, 8.507059e+37
    %v301 = vand.u32 %v260, 2147483648
    %v302 = vor.u32 1.1754944e-38, %v301
    %v303 = vsel %vm300, %v302, %v298
    %v304 = vmul.f32 1.0, %v303
    %v305 = vrcp.pop %v261
    %v306 = vmul.f32 %v261, %v305
    %v307 = vsub.f32 1.0, %v306
    %v308 = vmul.f32 %v305, %v307
    %v309 = vadd.f32 %v305, %v308
    %vm310 = vweird.f32 %v261
    %vm311 = vweird.f32 %v305
    %vm312 = vmor %vm310, %vm311
    %v313 = vsel %vm312, %v305, %v309
    %v314 = vand.u32 2147483647, %v261
    %vm315 = vcmp.eq.f32.partialorder %v314, 8.507059e+37
    %v316 = vand.u32 %v261, 2147483648
    %v317 = vor.u32 1.1754944e-38, %v316
    %v318 = vsel %vm315, %v317, %v313
    %v319 = vmul.f32 1.0, %v318
    %v320 = vrcp.pop %v262
    %v321 = vmul.f32 %v262, %v320
    %v322 = vsub.f32 1.0, %v321
    %v323 = vmul.f32 %v320, %v322
    %v324 = vadd.f32 %v320, %v323
    %vm325 = vweird.f32 %v262
    %vm326 = vweird.f32 %v320
    %vm327 = vmor %vm325, %vm326
    %v328 = vsel %vm327, %v320, %v324
    %v329 = vand.u32 2147483647, %v262
    %vm330 = vcmp.eq.f32.partialorder %v329, 8.507059e+37
    %v331 = vand.u32 %v262, 2147483648
    %v332 = vor.u32 1.1754944e-38, %v331
    %v333 = vsel %vm330, %v332, %v328
    %v334 = vmul.f32 1.0, %v333
    %v335 = vrcp.pop %v263
    %v336 = vmul.f32 %v263, %v335
    %v337 = vsub.f32 1.0, %v336
    %v338 = vmul.f32 %v335, %v337
    %v339 = vadd.f32 %v335, %v338
    %vm340 = vweird.f32 %v263
    %vm341 = vweird.f32 %v335
    %vm342 = vmor %vm340, %vm341
    %v343 = vsel %vm342, %v335, %v339
    %v344 = vand.u32 2147483647, %v263
    %vm345 = vcmp.eq.f32.partialorder %v344, 8.507059e+37
    %v346 = vand.u32 %v263, 2147483648
    %v347 = vor.u32 1.1754944e-38, %v346
    %v348 = vsel %vm345, %v347, %v343
    %v349 = vmul.f32 1.0, %v348
    %v350 = vrcp.pop %v264
    %v351 = vmul.f32 %v264, %v350
    %v352 = vsub.f32 1.0, %v351
    %v353 = vmul.f32 %v350, %v352
    %v354 = vadd.f32 %v350, %v353
    %vm355 = vweird.f32 %v264
    %vm356 = vweird.f32 %v350
    %vm357 = vmor %vm355, %vm356
    %v358 = vsel %vm357, %v350, %v354
    %v359 = vand.u32 2147483647, %v264
    %vm360 = vcmp.eq.f32.partialorder %v359, 8.507059e+37
    %v361 = vand.u32 %v264, 2147483648
    %v362 = vor.u32 1.1754944e-38, %v361
    %v363 = vsel %vm360, %v362, %v358
    %v364 = vmul.f32 1.0, %v363
    %v365 = vrcp.pop %v265
    %v366 = vmul.f32 %v265, %v365
    %v367 = vsub.f32 1.0, %v366
    %v368 = vmul.f32 %v365, %v367
    %v369 = vadd.f32 %v365, %v368
    %vm370 = vweird.f32 %v265
    %vm371 = vweird.f32 %v365
    %vm372 = vmor %vm370, %vm371
    %v373 = vsel %vm372, %v365, %v369
    %v374 = vand.u32 2147483647, %v265
    %vm375 = vcmp.eq.f32.partialorder %v374, 8.507059e+37
    %v376 = vand.u32 %v265, 2147483648
    %v377 = vor.u32 1.1754944e-38, %v376
    %v378 = vsel %vm375, %v377, %v373
    %v379 = vmul.f32 1.0, %v378
    %v380 = vrcp.pop %v266
    %v381 = vmul.f32 %v266, %v380
    %v382 = vsub.f32 1.0, %v381
    %v383 = vmul.f32 %v380, %v382
    %v384 = vadd.f32 %v380, %v383
    %vm385 = vweird.f32 %v266
    %vm386 = vweird.f32 %v380
    %vm387 = vmor %vm385, %vm386
    %v388 = vsel %vm387, %v380, %v384
    %v389 = vand.u32 2147483647, %v266
    %vm390 = vcmp.eq.f32.partialorder %v389, 8.507059e+37
    %v391 = vand.u32 %v266, 2147483648
    %v392 = vor.u32 1.1754944e-38, %v391
    %v393 = vsel %vm390, %v392, %v388
    %v394 = vmul.f32 1.0, %v393
    %v395 = vrcp.pop %v267
    %v396 = vmul.f32 %v267, %v395
    %v397 = vsub.f32 1.0, %v396
    %v398 = vmul.f32 %v395, %v397
    %v399 = vadd.f32 %v395, %v398
    %vm400 = vweird.f32 %v267
    %vm401 = vweird.f32 %v395
    %vm402 = vmor %vm400, %vm401
    %v403 = vsel %vm402, %v395, %v399
    %v404 = vand.u32 2147483647, %v267
    %vm405 = vcmp.eq.f32.partialorder %v404, 8.507059e+37
    %v406 = vand.u32 %v267, 2147483648
    %v407 = vor.u32 1.1754944e-38, %v406
    %v408 = vsel %vm405, %v407, %v403
    %v409 = vmul.f32 1.0, %v408
    %v410 = vrcp.pop %v268
    %v411 = vmul.f32 %v268, %v410
    %v412 = vsub.f32 1.0, %v411
    %v413 = vmul.f32 %v410, %v412
    %v414 = vadd.f32 %v410, %v413
    %vm415 = vweird.f32 %v268
    %vm416 = vweird.f32 %v410
    %vm417 = vmor %vm415, %vm416
    %v418 = vsel %vm417, %v410, %v414
    %v419 = vand.u32 2147483647, %v268
    %vm420 = vcmp.eq.f32.partialorder %v419, 8.507059e+37
    %v421 = vand.u32 %v268, 2147483648
    %v422 = vor.u32 1.1754944e-38, %v421
    %v423 = vsel %vm420, %v422, %v418
    %v424 = vmul.f32 1.0, %v423
    %v425 = vrcp.pop %v269
    %v426 = vmul.f32 %v269, %v425
    %v427 = vsub.f32 1.0, %v426
    %v428 = vmul.f32 %v425, %v427
    %v429 = vadd.f32 %v425, %v428
    %vm430 = vweird.f32 %v269
    %vm431 = vweird.f32 %v425
    %vm432 = vmor %vm430, %vm431
    %v433 = vsel %vm432, %v425, %v429
    %v434 = vand.u32 2147483647, %v269
    %vm435 = vcmp.eq.f32.partialorder %v434, 8.507059e+37
    %v436 = vand.u32 %v269, 2147483648
    %v437 = vor.u32 1.1754944e-38, %v436
    %v438 = vsel %vm435, %v437, %v433
    %v439 = vmul.f32 1.0, %v438
    %v440 = vrcp.pop %v270
    %v441 = vmul.f32 %v270, %v440
    %v442 = vsub.f32 1.0, %v441
    %v443 = vmul.f32 %v440, %v442
    %v444 = vadd.f32 %v440, %v443
    %vm445 = vweird.f32 %v270
    %vm446 = vweird.f32 %v440
    %vm447 = vmor %vm445, %vm446
    %v448 = vsel %vm447, %v440, %v444
    %v449 = vand.u32 2147483647, %v270
    %vm450 = vcmp.eq.f32.partialorder %v449, 8.507059e+37
    %v451 = vand.u32 %v270, 2147483648
    %v452 = vor.u32 1.1754944e-38, %v451
    %v453 = vsel %vm450, %v452, %v448
    %v454 = vmul.f32 1.0, %v453
    %v455 = vrcp.pop %v271
    %v456 = vmul.f32 %v271, %v455
    %v457 = vsub.f32 1.0, %v456
    %v458 = vmul.f32 %v455, %v457
    %v459 = vadd.f32 %v455, %v458
    %vm460 = vweird.f32 %v271
    %vm461 = vweird.f32 %v455
    %vm462 = vmor %vm460, %vm461
    %v463 = vsel %vm462, %v455, %v459
    %v464 = vand.u32 2147483647, %v271
    %vm465 = vcmp.eq.f32.partialorder %v464, 8.507059e+37
    %v466 = vand.u32 %v271, 2147483648
    %v467 = vor.u32 1.1754944e-38, %v466
    %v468 = vsel %vm465, %v467, %v463
    %v469 = vmul.f32 1.0, %v468
    %v470 = vrcp.pop %v272
    %v471 = vmul.f32 %v272, %v470
    %v472 = vsub.f32 1.0, %v471
    %v473 = vmul.f32 %v470, %v472
    %v474 = vadd.f32 %v470, %v473
    %vm475 = vweird.f32 %v272
    %vm476 = vweird.f32 %v470
    %vm477 = vmor %vm475, %vm476
    %v478 = vsel %vm477, %v470, %v474
    %v479 = vand.u32 2147483647, %v272
    %vm480 = vcmp.eq.f32.partialorder %v479, 8.507059e+37
    %v481 = vand.u32 %v272, 2147483648
    %v482 = vor.u32 1.1754944e-38, %v481
    %v483 = vsel %vm480, %v482, %v478
    %v484 = vmul.f32 1.0, %v483
    %v485 = vrcp.pop %v273
    %v486 = vmul.f32 %v273, %v485
    %v487 = vsub.f32 1.0, %v486
    %v488 = vmul.f32 %v485, %v487
    %v489 = vadd.f32 %v485, %v488
    %vm490 = vweird.f32 %v273
    %vm491 = vweird.f32 %v485
    %vm492 = vmor %vm490, %vm491
    %v493 = vsel %vm492, %v485, %v489
    %v494 = vand.u32 2147483647, %v273
    %vm495 = vcmp.eq.f32.partialorder %v494, 8.507059e+37
    %v496 = vand.u32 %v273, 2147483648
    %v497 = vor.u32 1.1754944e-38, %v496
    %v498 = vsel %vm495, %v497, %v493
    %v499 = vmul.f32 1.0, %v498
    %v500 = vrcp.pop %v274
    %v501 = vmul.f32 %v274, %v500
    %v502 = vsub.f32 1.0, %v501
    %v503 = vmul.f32 %v500, %v502
    %v504 = vadd.f32 %v500, %v503
    %vm505 = vweird.f32 %v274
    %vm506 = vweird.f32 %v500
    %vm507 = vmor %vm505, %vm506
    %v508 = vsel %vm507, %v500, %v504
    %v509 = vand.u32 2147483647, %v274
    %vm510 = vcmp.eq.f32.partialorder %v509, 8.507059e+37
    %v511 = vand.u32 %v274, 2147483648
    %v512 = vor.u32 1.1754944e-38, %v511
    %v513 = vsel %vm510, %v512, %v508
    %v514 = vmul.f32 1.0, %v513
    %v515 = vmul.f32 %v289, 1.0614054
    %v516 = vmul.f32 %v304, 1.0614054
    %v517 = vmul.f32 %v319, 1.0614054
    %v518 = vmul.f32 %v334, 1.0614054
    %v519 = vmul.f32 %v349, 1.0614054
    %v520 = vmul.f32 %v364, 1.0614054
    %v521 = vmul.f32 %v379, 1.0614054
    %v522 = vmul.f32 %v394, 1.0614054
    %v523 = vmul.f32 %v409, 1.0614054
    %v524 = vmul.f32 %v424, 1.0614054
    %v525 = vmul.f32 %v439, 1.0614054
    %v526 = vmul.f32 %v454, 1.0614054
    %v527 = vmul.f32 %v469, 1.0614054
    %v528 = vmul.f32 %v484, 1.0614054
    %v529 = vmul.f32 %v499, 1.0614054
    %v530 = vmul.f32 %v514, 1.0614054
    %v531 = vadd.f32 %v515, -1.4531521
    %v532 = vadd.f32 %v516, -1.4531521
    %v533 = vadd.f32 %v517, -1.4531521
    %v534 = vadd.f32 %v518, -1.4531521
    %v535 = vadd.f32 %v519, -1.4531521
    %v536 = vadd.f32 %v520, -1.4531521
    %v537 = vadd.f32 %v521, -1.4531521
    %v538 = vadd.f32 %v522, -1.4531521
    %v539 = vadd.f32 %v523, -1.4531521
    %v540 = vadd.f32 %v524, -1.4531521
    %v541 = vadd.f32 %v525, -1.4531521
    %v542 = vadd.f32 %v526, -1.4531521
    %v543 = vadd.f32 %v527, -1.4531521
    %v544 = vadd.f32 %v528, -1.4531521
    %v545 = vadd.f32 %v529, -1.4531521
    %v546 = vadd.f32 %v530, -1.4531521
    %v547 = vmul.f32 %v289, %v531
    %v548 = vmul.f32 %v304, %v532
    %v549 = vmul.f32 %v319, %v533
    %v550 = vmul.f32 %v334, %v534
    %v551 = vmul.f32 %v349, %v535
    %v552 = vmul.f32 %v364, %v536
    %v553 = vmul.f32 %v379, %v537
    %v554 = vmul.f32 %v394, %v538
    %v555 = vmul.f32 %v409, %v539
    %v556 = vmul.f32 %v424, %v540
    %v557 = vmul.f32 %v439, %v541
    %v558 = vmul.f32 %v454, %v542
    %v559 = vmul.f32 %v469, %v543
    %v560 = vmul.f32 %v484, %v544
    %v561 = vmul.f32 %v499, %v545
    %v562 = vmul.f32 %v514, %v546
    %v563 = vadd.f32 %v547, 1.4214138
    %v564 = vadd.f32 %v548, 1.4214138
    %v565 = vadd.f32 %v549, 1.4214138
    %v566 = vadd.f32 %v550, 1.4214138
    %v567 = vadd.f32 %v551, 1.4214138
    %v568 = vadd.f32 %v552, 1.4214138
    %v569 = vadd.f32 %v553, 1.4214138
    %v570 = vadd.f32 %v554, 1.4214138
    %v571 = vadd.f32 %v555, 1.4214138
    %v572 = vadd.f32 %v556, 1.4214138
    %v573 = vadd.f32 %v557, 1.4214138
    %v574 = vadd.f32 %v558, 1.4214138
    %v575 = vadd.f32 %v559, 1.4214138
    %v576 = vadd.f32 %v560, 1.4214138
    %v577 = vadd.f32 %v561, 1.4214138
    %v578 = vadd.f32 %v562, 1.4214138
    %v579 = vmul.f32 %v289, %v563
    %v580 = vmul.f32 %v304, %v564
    %v581 = vmul.f32 %v319, %v565
    %v582 = vmul.f32 %v334, %v566
    %v583 = vmul.f32 %v349, %v567
    %v584 = vmul.f32 %v364, %v568
    %v585 = vmul.f32 %v379, %v569
    %v586 = vmul.f32 %v394, %v570
    %v587 = vmul.f32 %v409, %v571
    %v588 = vmul.f32 %v424, %v572
    %v589 = vmul.f32 %v439, %v573
    %v590 = vmul.f32 %v454, %v574
    %v591 = vmul.f32 %v469, %v575
    %v592 = vmul.f32 %v484, %v576
    %v593 = vmul.f32 %v499, %v577
    %v594 = vmul.f32 %v514, %v578
    %v595 = vadd.f32 %v579, -0.28449672
    %v596 = vadd.f32 %v580, -0.28449672
    %v597 = vadd.f32 %v581, -0.28449672
    %v598 = vadd.f32 %v582, -0.28449672
    %v599 = vadd.f32 %v583, -0.28449672
    %v600 = vadd.f32 %v584, -0.28449672
    %v601 = vadd.f32 %v585, -0.28449672
    %v602 = vadd.f32 %v586, -0.28449672
    %v603 = vadd.f32 %v587, -0.28449672
    %v604 = vadd.f32 %v588, -0.28449672
    %v605 = vadd.f32 %v589, -0.28449672
    %v606 = vadd.f32 %v590, -0.28449672
    %v607 = vadd.f32 %v591, -0.28449672
    %v608 = vadd.f32 %v592, -0.28449672
    %v609 = vadd.f32 %v593, -0.28449672
    %v610 = vadd.f32 %v594, -0.28449672
    %v611 = vmul.f32 %v289, %v595
    %v612 = vmul.f32 %v304, %v596
    %v613 = vmul.f32 %v319, %v597
    %v614 = vmul.f32 %v334, %v598
    %v615 = vmul.f32 %v349, %v599
    %v616 = vmul.f32 %v364, %v600
    %v617 = vmul.f32 %v379, %v601
    %v618 = vmul.f32 %v394, %v602
    %v619 = vmul.f32 %v409, %v603
    %v620 = vmul.f32 %v424, %v604
    %v621 = vmul.f32 %v439, %v605
    %v622 = vmul.f32 %v454, %v606
    %v623 = vmul.f32 %v469, %v607
    %v624 = vmul.f32 %v484, %v608
    %v625 = vmul.f32 %v499, %v609
    %v626 = vmul.f32 %v514, %v610
    %v627 = vadd.f32 %v611, 0.2548296
    %v628 = vadd.f32 %v612, 0.2548296
    %v629 = vadd.f32 %v613, 0.2548296
    %v630 = vadd.f32 %v614, 0.2548296
    %v631 = vadd.f32 %v615, 0.2548296
    %v632 = vadd.f32 %v616, 0.2548296
    %v633 = vadd.f32 %v617, 0.2548296
    %v634 = vadd.f32 %v618, 0.2548296
    %v635 = vadd.f32 %v619, 0.2548296
    %v636 = vadd.f32 %v620, 0.2548296
    %v637 = vadd.f32 %v621, 0.2548296
    %v638 = vadd.f32 %v622, 0.2548296
    %v639 = vadd.f32 %v623, 0.2548296
    %v640 = vadd.f32 %v624, 0.2548296
    %v641 = vadd.f32 %v625, 0.2548296
    %v642 = vadd.f32 %v626, 0.2548296
    %v643 = vmul.f32 %v289, %v627
    %v644 = vmul.f32 %v304, %v628
    %v645 = vmul.f32 %v319, %v629
    %v646 = vmul.f32 %v334, %v630
    %v647 = vmul.f32 %v349, %v631
    %v648 = vmul.f32 %v364, %v632
    %v649 = vmul.f32 %v379, %v633
    %v650 = vmul.f32 %v394, %v634
    %v651 = vmul.f32 %v409, %v635
    %v652 = vmul.f32 %v424, %v636
    %v653 = vmul.f32 %v439, %v637
    %v654 = vmul.f32 %v454, %v638
    %v655 = vmul.f32 %v469, %v639
    %v656 = vmul.f32 %v484, %v640
    %v657 = vmul.f32 %v499, %v641
    %v658 = vmul.f32 %v514, %v642
    %v659 = vsub.f32 0.0, %v227
    %v660 = vsub.f32 0.0, %v228
    %v661 = vsub.f32 0.0, %v229
    %v662 = vsub.f32 0.0, %v230
    %v663 = vsub.f32 0.0, %v231
    %v664 = vsub.f32 0.0, %v232
    %v665 = vsub.f32 0.0, %v233
    %v666 = vsub.f32 0.0, %v234
    %v667 = vsub.f32 0.0, %v235
    %v668 = vsub.f32 0.0, %v236
    %v669 = vsub.f32 0.0, %v237
    %v670 = vsub.f32 0.0, %v238
    %v671 = vsub.f32 0.0, %v239
    %v672 = vsub.f32 0.0, %v240
    %v673 = vsub.f32 0.0, %v241
    %v674 = vsub.f32 0.0, %v242
    %v675 = vmul.f32 %v659, %v227
    %v676 = vmul.f32 %v660, %v228
    %v677 = vmul.f32 %v661, %v229
    %v678 = vmul.f32 %v662, %v230
    %v679 = vmul.f32 %v663, %v231
    %v680 = vmul.f32 %v664, %v232
    %v681 = vmul.f32 %v665, %v233
    %v682 = vmul.f32 %v666, %v234
    %v683 = vmul.f32 %v667, %v235
    %v684 = vmul.f32 %v668, %v236
    %v685 = vmul.f32 %v669, %v237
    %v686 = vmul.f32 %v670, %v238
    %v687 = vmul.f32 %v671, %v239
    %v688 = vmul.f32 %v672, %v240
    %v689 = vmul.f32 %v673, %v241
    %v690 = vmul.f32 %v674, %v242
    %v691 = vmul.f32 %v675, 1.442695
    %v692 = vpow.pop %v691
    %v693 = vmul.f32 %v676, 1.442695
    %v694 = vpow.pop %v693
    %v695 = vmul.f32 %v677, 1.442695
    %v696 = vpow.pop %v695
    %v697 = vmul.f32 %v678, 1.442695
    %v698 = vpow.pop %v697
    %v699 = vmul.f32 %v679, 1.442695
    %v700 = vpow.pop %v699
    %v701 = vmul.f32 %v680, 1.442695
    %v702 = vpow.pop %v701
    %v703 = vmul.f32 %v681, 1.442695
    %v704 = vpow.pop %v703
    %v705 = vmul.f32 %v682, 1.442695
    %v706 = vpow.pop %v705
    %v707 = vmul.f32 %v683, 1.442695
    %v708 = vpow.pop %v707
    %v709 = vmul.f32 %v684, 1.442695
    %v710 = vpow.pop %v709
    %v711 = vmul.f32 %v685, 1.442695
    %v712 = vpow.pop %v711
    %v713 = vmul.f32 %v686, 1.442695
    %v714 = vpow.pop %v713
    %v715 = vmul.f32 %v687, 1.442695
    %v716 = vpow.pop %v715
    %v717 = vmul.f32 %v688, 1.442695
    %v718 = vpow.pop %v717
    %v719 = vmul.f32 %v689, 1.442695
    %v720 = vpow.pop %v719
    %v721 = vmul.f32 %v690, 1.442695
    %v722 = vpow.pop %v721
    %v723 = vmul.f32 %v643, %v692
    %v724 = vmul.f32 %v644, %v694
    %v725 = vmul.f32 %v645, %v696
    %v726 = vmul.f32 %v646, %v698
    %v727 = vmul.f32 %v647, %v700
    %v728 = vmul.f32 %v648, %v702
    %v729 = vmul.f32 %v649, %v704
    %v730 = vmul.f32 %v650, %v706
    %v731 = vmul.f32 %v651, %v708
    %v732 = vmul.f32 %v652, %v710
    %v733 = vmul.f32 %v653, %v712
    %v734 = vmul.f32 %v654, %v714
    %v735 = vmul.f32 %v655, %v716
    %v736 = vmul.f32 %v656, %v718
    %v737 = vmul.f32 %v657, %v720
    %v738 = vmul.f32 %v658, %v722
    %v739 = vsub.f32 1.0, %v723
    %v740 = vsub.f32 1.0, %v724
    %v741 = vsub.f32 1.0, %v725
    %v742 = vsub.f32 1.0, %v726
    %v743 = vsub.f32 1.0, %v727
    %v744 = vsub.f32 1.0, %v728
    %v745 = vsub.f32 1.0, %v729
    %v746 = vsub.f32 1.0, %v730
    %v747 = vsub.f32 1.0, %v731
    %v748 = vsub.f32 1.0, %v732
    %v749 = vsub.f32 1.0, %v733
    %v750 = vsub.f32 1.0, %v734
    %v751 = vsub.f32 1.0, %v735
    %v752 = vsub.f32 1.0, %v736
    %v753 = vsub.f32 1.0, %v737
    %v754 = vsub.f32 1.0, %v738
    %vm755 = vcmp.ge.f32.partialorder %v211, 0.0
    %vm756 = vcmp.ge.f32.partialorder %v212, 0.0
    %vm757 = vcmp.ge.f32.partialorder %v213, 0.0
    %vm758 = vcmp.ge.f32.partialorder %v214, 0.0
    %vm759 = vcmp.ge.f32.partialorder %v215, 0.0
    %vm760 = vcmp.ge.f32.partialorder %v216, 0.0
    %vm761 = vcmp.ge.f32.partialorder %v217, 0.0
    %vm762 = vcmp.ge.f32.partialorder %v218, 0.0
    %vm763 = vcmp.ge.f32.partialorder %v219, 0.0
    %vm764 = vcmp.ge.f32.partialorder %v220, 0.0
    %vm765 = vcmp.ge.f32.partialorder %v221, 0.0
    %vm766 = vcmp.ge.f32.partialorder %v222, 0.0
    %vm767 = vcmp.ge.f32.partialorder %v223, 0.0
    %vm768 = vcmp.ge.f32.partialorder %v224, 0.0
    %vm769 = vcmp.ge.f32.partialorder %v225, 0.0
    %vm770 = vcmp.ge.f32.partialorder %v226, 0.0
    %v771 = vsub.f32 0.0, %v739
    %v772 = vsub.f32 0.0, %v740
    %v773 = vsub.f32 0.0, %v741
    %v774 = vsub.f32 0.0, %v742
    %v775 = vsub.f32 0.0, %v743
    %v776 = vsub.f32 0.0, %v744
    %v777 = vsub.f32 0.0, %v745
    %v778 = vsub.f32 0.0, %v746
    %v779 = vsub.f32 0.0, %v747
    %v780 = vsub.f32 0.0, %v748
    %v781 = vsub.f32 0.0, %v749
    %v782 = vsub.f32 0.0, %v750
    %v783 = vsub.f32 0.0, %v751
    %v784 = vsub.f32 0.0, %v752
    %v785 = vsub.f32 0.0, %v753
    %v786 = vsub.f32 0.0, %v754
    %v787 = vsel %vm755, %v739, %v771
    %v788 = vsel %vm756, %v740, %v772
    %v789 = vsel %vm757, %v741, %v773
    %v790 = vsel %vm758, %v742, %v774
    %v791 = vsel %vm759, %v743, %v775
    %v792 = vsel %vm760, %v744, %v776
    %v793 = vsel %vm761, %v745, %v777
    %v794 = vsel %vm762, %v746, %v778
    %v795 = vsel %vm763, %v747, %v779
    %v796 = vsel %vm764, %v748, %v780
    %v797 = vsel %vm765, %v749, %v781
    %v798 = vsel %vm766, %v750, %v782
    %v799 = vsel %vm767, %v751, %v783
    %v800 = vsel %vm768, %v752, %v784
    %v801 = vsel %vm769, %v753, %v785
    %v802 = vsel %vm770, %v754, %v786
    %v803 = vadd.f32 %v787, 1.0
    %v804 = vadd.f32 %v788, 1.0
    %v805 = vadd.f32 %v789, 1.0
    %v806 = vadd.f32 %v790, 1.0
    %v807 = vadd.f32 %v791, 1.0
    %v808 = vadd.f32 %v792, 1.0
    %v809 = vadd.f32 %v793, 1.0
    %v810 = vadd.f32 %v794, 1.0
    %v811 = vadd.f32 %v795, 1.0
    %v812 = vadd.f32 %v796, 1.0
    %v813 = vadd.f32 %v797, 1.0
    %v814 = vadd.f32 %v798, 1.0
    %v815 = vadd.f32 %v799, 1.0
    %v816 = vadd.f32 %v800, 1.0
    %v817 = vadd.f32 %v801, 1.0
    %v818 = vadd.f32 %v802, 1.0
    %v819 = vmul.f32 %v195, %v803
    %v820 = vmul.f32 %v196, %v804
    %v821 = vmul.f32 %v197, %v805
    %v822 = vmul.f32 %v198, %v806
    %v823 = vmul.f32 %v199, %v807
    %v824 = vmul.f32 %v200, %v808
    %v825 = vmul.f32 %v201, %v809
    %v826 = vmul.f32 %v202, %v810
    %v827 = vmul.f32 %v203, %v811
    %v828 = vmul.f32 %v204, %v812
    %v829 = vmul.f32 %v205, %v813
    %v830 = vmul.f32 %v206, %v814
    %v831 = vmul.f32 %v207, %v815
    %v832 = vmul.f32 %v208, %v816
    %v833 = vmul.f32 %v209, %v817
    %v834 = vmul.f32 %v210, %v818
    %v835 = vld [vmem:[%s3] sm:$0xff]
    %v836 = vld [vmem:[%s3 + $0x8] sm:$0xff]
    %v837 = vld [vmem:[%s3 + $0x10] sm:$0xff]
    %v838 = vld [vmem:[%s3 + $0x18] sm:$0xff]
    %v839 = vld [vmem:[%s3 + $0x20] sm:$0xff]
    %v840 = vld [vmem:[%s3 + $0x28] sm:$0xff]
    %v841 = vld [vmem:[%s3 + $0x30] sm:$0xff]
    %v842 = vld [vmem:[%s3 + $0x38] sm:$0xff]
    %v843 = vld [vmem:[%s3 + $0x40] sm:$0xff]
    %v844 = vld [vmem:[%s3 + $0x48] sm:$0xff]
    %v845 = vld [vmem:[%s3 + $0x50] sm:$0xff]
    %v846 = vld [vmem:[%s3 + $0x58] sm:$0xff]
    %v847 = vld [vmem:[%s3 + $0x60] sm:$0xff]
    %v848 = vld [vmem:[%s3 + $0x68] sm:$0xff]
    %v849 = vld [vmem:[%s3 + $0x70] sm:$0xff]
    %v850 = vld [vmem:[%s3 + $0x78] sm:$0xff]
    %v851 = vld [vmem:[%s4] sm:$0x1]
    %v853 = vperm.slane %v851, 0
    %855 = vmatpush.msra.mxu0 %v850
    %856 = vmatpush.msra.mxu0 %v849
    %857 = vmatpush.msra.mxu0 %v848
    %858 = vmatpush.msra.mxu0 %v847
    %859 = vmatpush.msra.mxu0 %v846
    %860 = vmatpush.msra.mxu0 %v845
    %861 = vmatpush.msra.mxu0 %v844
    %862 = vmatpush.msra.mxu0 %v843
    %863 = vmatpush.msra.mxu0 %v842
    %864 = vmatpush.msra.mxu0 %v841
    %865 = vmatpush.msra.mxu0 %v840
    %866 = vmatpush.msra.mxu0 %v839
    %867 = vmatpush.msra.mxu0 %v838
    %868 = vmatpush.msra.mxu0 %v837
    %869 = vmatpush.msra.mxu0 %v836
    %870 = vmatpush.msra.mxu0 %v835
    %871 = vmatmul.f32.gmra.mxu0 %v819
    %v872 = vpop.f32.mrf.mxu0
    %v873 = vadd.f32 %v853, %v872
    %874 = vmatmul.f32.gmra.mxu0 %v820
    %v875 = vpop.f32.mrf.mxu0
    %v876 = vadd.f32 %v853, %v875
    %877 = vmatmul.f32.gmra.mxu0 %v821
    %v878 = vpop.f32.mrf.mxu0
    %v879 = vadd.f32 %v853, %v878
    %880 = vmatmul.f32.gmra.mxu0 %v822
    %v881 = vpop.f32.mrf.mxu0
    %v882 = vadd.f32 %v853, %v881
    %883 = vmatmul.f32.gmra.mxu0 %v823
    %v884 = vpop.f32.mrf.mxu0
    %v885 = vadd.f32 %v853, %v884
    %886 = vmatmul.f32.gmra.mxu0 %v824
    %v887 = vpop.f32.mrf.mxu0
    %v888 = vadd.f32 %v853, %v887
    %889 = vmatmul.f32.gmra.mxu0 %v825
    %v890 = vpop.f32.mrf.mxu0
    %v891 = vadd.f32 %v853, %v890
    %892 = vmatmul.f32.gmra.mxu0 %v826
    %v893 = vpop.f32.mrf.mxu0
    %v894 = vadd.f32 %v853, %v893
    %895 = vmatmul.f32.gmra.mxu0 %v827
    %v896 = vpop.f32.mrf.mxu0
    %v897 = vadd.f32 %v853, %v896
    %898 = vmatmul.f32.gmra.mxu0 %v828
    %v899 = vpop.f32.mrf.mxu0
    %v900 = vadd.f32 %v853, %v899
    %901 = vmatmul.f32.gmra.mxu0 %v829
    %v902 = vpop.f32.mrf.mxu0
    %v903 = vadd.f32 %v853, %v902
    %904 = vmatmul.f32.gmra.mxu0 %v830
    %v905 = vpop.f32.mrf.mxu0
    %v906 = vadd.f32 %v853, %v905
    %907 = vmatmul.f32.gmra.mxu0 %v831
    %v908 = vpop.f32.mrf.mxu0
    %v909 = vadd.f32 %v853, %v908
    %910 = vmatmul.f32.gmra.mxu0 %v832
    %v911 = vpop.f32.mrf.mxu0
    %v912 = vadd.f32 %v853, %v911
    %913 = vmatmul.f32.gmra.mxu0 %v833
    %v914 = vpop.f32.mrf.mxu0
    %v915 = vadd.f32 %v853, %v914
    %916 = vmatmul.f32.gmra.mxu0 %v834
    %v917 = vpop.f32.mrf.mxu0
    %v918 = vadd.f32 %v853, %v917
    %919 = vdwg.mxu0
    %v920 = vmul.f32 %v873, 0.5
    %v921 = vmul.f32 %v876, 0.5
    %v922 = vmul.f32 %v879, 0.5
    %v923 = vmul.f32 %v882, 0.5
    %v924 = vmul.f32 %v885, 0.5
    %v925 = vmul.f32 %v888, 0.5
    %v926 = vmul.f32 %v891, 0.5
    %v927 = vmul.f32 %v894, 0.5
    %v928 = vmul.f32 %v897, 0.5
    %v929 = vmul.f32 %v900, 0.5
    %v930 = vmul.f32 %v903, 0.5
    %v931 = vmul.f32 %v906, 0.5
    %v932 = vmul.f32 %v909, 0.5
    %v933 = vmul.f32 %v912, 0.5
    %v934 = vmul.f32 %v915, 0.5
    %v935 = vmul.f32 %v918, 0.5
    %v936 = vmul.f32 %v873, 0.70710677
    %v937 = vmul.f32 %v876, 0.70710677
    %v938 = vmul.f32 %v879, 0.70710677
    %v939 = vmul.f32 %v882, 0.70710677
    %v940 = vmul.f32 %v885, 0.70710677
    %v941 = vmul.f32 %v888, 0.70710677
    %v942 = vmul.f32 %v891, 0.70710677
    %v943 = vmul.f32 %v894, 0.70710677
    %v944 = vmul.f32 %v897, 0.70710677
    %v945 = vmul.f32 %v900, 0.70710677
    %v946 = vmul.f32 %v903, 0.70710677
    %v947 = vmul.f32 %v906, 0.70710677
    %v948 = vmul.f32 %v909, 0.70710677
    %v949 = vmul.f32 %v912, 0.70710677
    %v950 = vmul.f32 %v915, 0.70710677
    %v951 = vmul.f32 %v918, 0.70710677
    %v952 = vand.u32 2147483647, %v936
    %v953 = vand.u32 2147483647, %v937
    %v954 = vand.u32 2147483647, %v938
    %v955 = vand.u32 2147483647, %v939
    %v956 = vand.u32 2147483647, %v940
    %v957 = vand.u32 2147483647, %v941
    %v958 = vand.u32 2147483647, %v942
    %v959 = vand.u32 2147483647, %v943
    %v960 = vand.u32 2147483647, %v944
    %v961 = vand.u32 2147483647, %v945
    %v962 = vand.u32 2147483647, %v946
    %v963 = vand.u32 2147483647, %v947
    %v964 = vand.u32 2147483647, %v948
    %v965 = vand.u32 2147483647, %v949
    %v966 = vand.u32 2147483647, %v950
    %v967 = vand.u32 2147483647, %v951
    %v968 = vmul.f32 %v952, 0.3275911
    %v969 = vmul.f32 %v953, 0.3275911
    %v970 = vmul.f32 %v954, 0.3275911
    %v971 = vmul.f32 %v955, 0.3275911
    %v972 = vmul.f32 %v956, 0.3275911
    %v973 = vmul.f32 %v957, 0.3275911
    %v974 = vmul.f32 %v958, 0.3275911
    %v975 = vmul.f32 %v959, 0.3275911
    %v976 = vmul.f32 %v960, 0.3275911
    %v977 = vmul.f32 %v961, 0.3275911
    %v978 = vmul.f32 %v962, 0.3275911
    %v979 = vmul.f32 %v963, 0.3275911
    %v980 = vmul.f32 %v964, 0.3275911
    %v981 = vmul.f32 %v965, 0.3275911
    %v982 = vmul.f32 %v966, 0.3275911
    %v983 = vmul.f32 %v967, 0.3275911
    %v984 = vadd.f32 %v968, 1.0
    %v985 = vadd.f32 %v969, 1.0
    %v986 = vadd.f32 %v970, 1.0
    %v987 = vadd.f32 %v971, 1.0
    %v988 = vadd.f32 %v972, 1.0
    %v989 = vadd.f32 %v973, 1.0
    %v990 = vadd.f32 %v974, 1.0
    %v991 = vadd.f32 %v975, 1.0
    %v992 = vadd.f32 %v976, 1.0
    %v993 = vadd.f32 %v977, 1.0
    %v994 = vadd.f32 %v978, 1.0
    %v995 = vadd.f32 %v979, 1.0
    %v996 = vadd.f32 %v980, 1.0
    %v997 = vadd.f32 %v981, 1.0
    %v998 = vadd.f32 %v982, 1.0
    %v999 = vadd.f32 %v983, 1.0
    %v1000 = vrcp.pop %v984
    %v1001 = vmul.f32 %v984, %v1000
    %v1002 = vsub.f32 1.0, %v1001
    %v1003 = vmul.f32 %v1000, %v1002
    %v1004 = vadd.f32 %v1000, %v1003
    %vm1005 = vweird.f32 %v984
    %vm1006 = vweird.f32 %v1000
    %vm1007 = vmor %vm1005, %vm1006
    %v1008 = vsel %vm1007, %v1000, %v1004
    %v1009 = vand.u32 2147483647, %v984
    %vm1010 = vcmp.eq.f32.partialorder %v1009, 8.507059e+37
    %v1011 = vand.u32 %v984, 2147483648
    %v1012 = vor.u32 1.1754944e-38, %v1011
    %v1013 = vsel %vm1010, %v1012, %v1008
    %v1014 = vmul.f32 1.0, %v1013
    %v1015 = vrcp.pop %v985
    %v1016 = vmul.f32 %v985, %v1015
    %v1017 = vsub.f32 1.0, %v1016
    %v1018 = vmul.f32 %v1015, %v1017
    %v1019 = vadd.f32 %v1015, %v1018
    %vm1020 = vweird.f32 %v985
    %vm1021 = vweird.f32 %v1015
    %vm1022 = vmor %vm1020, %vm1021
    %v1023 = vsel %vm1022, %v1015, %v1019
    %v1024 = vand.u32 2147483647, %v985
    %vm1025 = vcmp.eq.f32.partialorder %v1024, 8.507059e+37
    %v1026 = vand.u32 %v985, 2147483648
    %v1027 = vor.u32 1.1754944e-38, %v1026
    %v1028 = vsel %vm1025, %v1027, %v1023
    %v1029 = vmul.f32 1.0, %v1028
    %v1030 = vrcp.pop %v986
    %v1031 = vmul.f32 %v986, %v1030
    %v1032 = vsub.f32 1.0, %v1031
    %v1033 = vmul.f32 %v1030, %v1032
    %v1034 = vadd.f32 %v1030, %v1033
    %vm1035 = vweird.f32 %v986
    %vm1036 = vweird.f32 %v1030
    %vm1037 = vmor %vm1035, %vm1036
    %v1038 = vsel %vm1037, %v1030, %v1034
    %v1039 = vand.u32 2147483647, %v986
    %vm1040 = vcmp.eq.f32.partialorder %v1039, 8.507059e+37
    %v1041 = vand.u32 %v986, 2147483648
    %v1042 = vor.u32 1.1754944e-38, %v1041
    %v1043 = vsel %vm1040, %v1042, %v1038
    %v1044 = vmul.f32 1.0, %v1043
    %v1045 = vrcp.pop %v987
    %v1046 = vmul.f32 %v987, %v1045
    %v1047 = vsub.f32 1.0, %v1046
    %v1048 = vmul.f32 %v1045, %v1047
    %v1049 = vadd.f32 %v1045, %v1048
    %vm1050 = vweird.f32 %v987
    %vm1051 = vweird.f32 %v1045
    %vm1052 = vmor %vm1050, %vm1051
    %v1053 = vsel %vm1052, %v1045, %v1049
    %v1054 = vand.u32 2147483647, %v987
    %vm1055 = vcmp.eq.f32.partialorder %v1054, 8.507059e+37
    %v1056 = vand.u32 %v987, 2147483648
    %v1057 = vor.u32 1.1754944e-38, %v1056
    %v1058 = vsel %vm1055, %v1057, %v1053
    %v1059 = vmul.f32 1.0, %v1058
    %v1060 = vrcp.pop %v988
    %v1061 = vmul.f32 %v988, %v1060
    %v1062 = vsub.f32 1.0, %v1061
    %v1063 = vmul.f32 %v1060, %v1062
    %v1064 = vadd.f32 %v1060, %v1063
    %vm1065 = vweird.f32 %v988
    %vm1066 = vweird.f32 %v1060
    %vm1067 = vmor %vm1065, %vm1066
    %v1068 = vsel %vm1067, %v1060, %v1064
    %v1069 = vand.u32 2147483647, %v988
    %vm1070 = vcmp.eq.f32.partialorder %v1069, 8.507059e+37
    %v1071 = vand.u32 %v988, 2147483648
    %v1072 = vor.u32 1.1754944e-38, %v1071
    %v1073 = vsel %vm1070, %v1072, %v1068
    %v1074 = vmul.f32 1.0, %v1073
    %v1075 = vrcp.pop %v989
    %v1076 = vmul.f32 %v989, %v1075
    %v1077 = vsub.f32 1.0, %v1076
    %v1078 = vmul.f32 %v1075, %v1077
    %v1079 = vadd.f32 %v1075, %v1078
    %vm1080 = vweird.f32 %v989
    %vm1081 = vweird.f32 %v1075
    %vm1082 = vmor %vm1080, %vm1081
    %v1083 = vsel %vm1082, %v1075, %v1079
    %v1084 = vand.u32 2147483647, %v989
    %vm1085 = vcmp.eq.f32.partialorder %v1084, 8.507059e+37
    %v1086 = vand.u32 %v989, 2147483648
    %v1087 = vor.u32 1.1754944e-38, %v1086
    %v1088 = vsel %vm1085, %v1087, %v1083
    %v1089 = vmul.f32 1.0, %v1088
    %v1090 = vrcp.pop %v990
    %v1091 = vmul.f32 %v990, %v1090
    %v1092 = vsub.f32 1.0, %v1091
    %v1093 = vmul.f32 %v1090, %v1092
    %v1094 = vadd.f32 %v1090, %v1093
    %vm1095 = vweird.f32 %v990
    %vm1096 = vweird.f32 %v1090
    %vm1097 = vmor %vm1095, %vm1096
    %v1098 = vsel %vm1097, %v1090, %v1094
    %v1099 = vand.u32 2147483647, %v990
    %vm1100 = vcmp.eq.f32.partialorder %v1099, 8.507059e+37
    %v1101 = vand.u32 %v990, 2147483648
    %v1102 = vor.u32 1.1754944e-38, %v1101
    %v1103 = vsel %vm1100, %v1102, %v1098
    %v1104 = vmul.f32 1.0, %v1103
    %v1105 = vrcp.pop %v991
    %v1106 = vmul.f32 %v991, %v1105
    %v1107 = vsub.f32 1.0, %v1106
    %v1108 = vmul.f32 %v1105, %v1107
    %v1109 = vadd.f32 %v1105, %v1108
    %vm1110 = vweird.f32 %v991
    %vm1111 = vweird.f32 %v1105
    %vm1112 = vmor %vm1110, %vm1111
    %v1113 = vsel %vm1112, %v1105, %v1109
    %v1114 = vand.u32 2147483647, %v991
    %vm1115 = vcmp.eq.f32.partialorder %v1114, 8.507059e+37
    %v1116 = vand.u32 %v991, 2147483648
    %v1117 = vor.u32 1.1754944e-38, %v1116
    %v1118 = vsel %vm1115, %v1117, %v1113
    %v1119 = vmul.f32 1.0, %v1118
    %v1120 = vrcp.pop %v992
    %v1121 = vmul.f32 %v992, %v1120
    %v1122 = vsub.f32 1.0, %v1121
    %v1123 = vmul.f32 %v1120, %v1122
    %v1124 = vadd.f32 %v1120, %v1123
    %vm1125 = vweird.f32 %v992
    %vm1126 = vweird.f32 %v1120
    %vm1127 = vmor %vm1125, %vm1126
    %v1128 = vsel %vm1127, %v1120, %v1124
    %v1129 = vand.u32 2147483647, %v992
    %vm1130 = vcmp.eq.f32.partialorder %v1129, 8.507059e+37
    %v1131 = vand.u32 %v992, 2147483648
    %v1132 = vor.u32 1.1754944e-38, %v1131
    %v1133 = vsel %vm1130, %v1132, %v1128
    %v1134 = vmul.f32 1.0, %v1133
    %v1135 = vrcp.pop %v993
    %v1136 = vmul.f32 %v993, %v1135
    %v1137 = vsub.f32 1.0, %v1136
    %v1138 = vmul.f32 %v1135, %v1137
    %v1139 = vadd.f32 %v1135, %v1138
    %vm1140 = vweird.f32 %v993
    %vm1141 = vweird.f32 %v1135
    %vm1142 = vmor %vm1140, %vm1141
    %v1143 = vsel %vm1142, %v1135, %v1139
    %v1144 = vand.u32 2147483647, %v993
    %vm1145 = vcmp.eq.f32.partialorder %v1144, 8.507059e+37
    %v1146 = vand.u32 %v993, 2147483648
    %v1147 = vor.u32 1.1754944e-38, %v1146
    %v1148 = vsel %vm1145, %v1147, %v1143
    %v1149 = vmul.f32 1.0, %v1148
    %v1150 = vrcp.pop %v994
    %v1151 = vmul.f32 %v994, %v1150
    %v1152 = vsub.f32 1.0, %v1151
    %v1153 = vmul.f32 %v1150, %v1152
    %v1154 = vadd.f32 %v1150, %v1153
    %vm1155 = vweird.f32 %v994
    %vm1156 = vweird.f32 %v1150
    %vm1157 = vmor %vm1155, %vm1156
    %v1158 = vsel %vm1157, %v1150, %v1154
    %v1159 = vand.u32 2147483647, %v994
    %vm1160 = vcmp.eq.f32.partialorder %v1159, 8.507059e+37
    %v1161 = vand.u32 %v994, 2147483648
    %v1162 = vor.u32 1.1754944e-38, %v1161
    %v1163 = vsel %vm1160, %v1162, %v1158
    %v1164 = vmul.f32 1.0, %v1163
    %v1165 = vrcp.pop %v995
    %v1166 = vmul.f32 %v995, %v1165
    %v1167 = vsub.f32 1.0, %v1166
    %v1168 = vmul.f32 %v1165, %v1167
    %v1169 = vadd.f32 %v1165, %v1168
    %vm1170 = vweird.f32 %v995
    %vm1171 = vweird.f32 %v1165
    %vm1172 = vmor %vm1170, %vm1171
    %v1173 = vsel %vm1172, %v1165, %v1169
    %v1174 = vand.u32 2147483647, %v995
    %vm1175 = vcmp.eq.f32.partialorder %v1174, 8.507059e+37
    %v1176 = vand.u32 %v995, 2147483648
    %v1177 = vor.u32 1.1754944e-38, %v1176
    %v1178 = vsel %vm1175, %v1177, %v1173
    %v1179 = vmul.f32 1.0, %v1178
    %v1180 = vrcp.pop %v996
    %v1181 = vmul.f32 %v996, %v1180
    %v1182 = vsub.f32 1.0, %v1181
    %v1183 = vmul.f32 %v1180, %v1182
    %v1184 = vadd.f32 %v1180, %v1183
    %vm1185 = vweird.f32 %v996
    %vm1186 = vweird.f32 %v1180
    %vm1187 = vmor %vm1185, %vm1186
    %v1188 = vsel %vm1187, %v1180, %v1184
    %v1189 = vand.u32 2147483647, %v996
    %vm1190 = vcmp.eq.f32.partialorder %v1189, 8.507059e+37
    %v1191 = vand.u32 %v996, 2147483648
    %v1192 = vor.u32 1.1754944e-38, %v1191
    %v1193 = vsel %vm1190, %v1192, %v1188
    %v1194 = vmul.f32 1.0, %v1193
    %v1195 = vrcp.pop %v997
    %v1196 = vmul.f32 %v997, %v1195
    %v1197 = vsub.f32 1.0, %v1196
    %v1198 = vmul.f32 %v1195, %v1197
    %v1199 = vadd.f32 %v1195, %v1198
    %vm1200 = vweird.f32 %v997
    %vm1201 = vweird.f32 %v1195
    %vm1202 = vmor %vm1200, %vm1201
    %v1203 = vsel %vm1202, %v1195, %v1199
    %v1204 = vand.u32 2147483647, %v997
    %vm1205 = vcmp.eq.f32.partialorder %v1204, 8.507059e+37
    %v1206 = vand.u32 %v997, 2147483648
    %v1207 = vor.u32 1.1754944e-38, %v1206
    %v1208 = vsel %vm1205, %v1207, %v1203
    %v1209 = vmul.f32 1.0, %v1208
    %v1210 = vrcp.pop %v998
    %v1211 = vmul.f32 %v998, %v1210
    %v1212 = vsub.f32 1.0, %v1211
    %v1213 = vmul.f32 %v1210, %v1212
    %v1214 = vadd.f32 %v1210, %v1213
    %vm1215 = vweird.f32 %v998
    %vm1216 = vweird.f32 %v1210
    %vm1217 = vmor %vm1215, %vm1216
    %v1218 = vsel %vm1217, %v1210, %v1214
    %v1219 = vand.u32 2147483647, %v998
    %vm1220 = vcmp.eq.f32.partialorder %v1219, 8.507059e+37
    %v1221 = vand.u32 %v998, 2147483648
    %v1222 = vor.u32 1.1754944e-38, %v1221
    %v1223 = vsel %vm1220, %v1222, %v1218
    %v1224 = vmul.f32 1.0, %v1223
    %v1225 = vrcp.pop %v999
    %v1226 = vmul.f32 %v999, %v1225
    %v1227 = vsub.f32 1.0, %v1226
    %v1228 = vmul.f32 %v1225, %v1227
    %v1229 = vadd.f32 %v1225, %v1228
    %vm1230 = vweird.f32 %v999
    %vm1231 = vweird.f32 %v1225
    %vm1232 = vmor %vm1230, %vm1231
    %v1233 = vsel %vm1232, %v1225, %v1229
    %v1234 = vand.u32 2147483647, %v999
    %vm1235 = vcmp.eq.f32.partialorder %v1234, 8.507059e+37
    %v1236 = vand.u32 %v999, 2147483648
    %v1237 = vor.u32 1.1754944e-38, %v1236
    %v1238 = vsel %vm1235, %v1237, %v1233
    %v1239 = vmul.f32 1.0, %v1238
    %v1240 = vmul.f32 %v1014, 1.0614054
    %v1241 = vmul.f32 %v1029, 1.0614054
    %v1242 = vmul.f32 %v1044, 1.0614054
    %v1243 = vmul.f32 %v1059, 1.0614054
    %v1244 = vmul.f32 %v1074, 1.0614054
    %v1245 = vmul.f32 %v1089, 1.0614054
    %v1246 = vmul.f32 %v1104, 1.0614054
    %v1247 = vmul.f32 %v1119, 1.0614054
    %v1248 = vmul.f32 %v1134, 1.0614054
    %v1249 = vmul.f32 %v1149, 1.0614054
    %v1250 = vmul.f32 %v1164, 1.0614054
    %v1251 = vmul.f32 %v1179, 1.0614054
    %v1252 = vmul.f32 %v1194, 1.0614054
    %v1253 = vmul.f32 %v1209, 1.0614054
    %v1254 = vmul.f32 %v1224, 1.0614054
    %v1255 = vmul.f32 %v1239, 1.0614054
    %v1256 = vadd.f32 %v1240, -1.4531521
    %v1257 = vadd.f32 %v1241, -1.4531521
    %v1258 = vadd.f32 %v1242, -1.4531521
    %v1259 = vadd.f32 %v1243, -1.4531521
    %v1260 = vadd.f32 %v1244, -1.4531521
    %v1261 = vadd.f32 %v1245, -1.4531521
    %v1262 = vadd.f32 %v1246, -1.4531521
    %v1263 = vadd.f32 %v1247, -1.4531521
    %v1264 = vadd.f32 %v1248, -1.4531521
    %v1265 = vadd.f32 %v1249, -1.4531521
    %v1266 = vadd.f32 %v1250, -1.4531521
    %v1267 = vadd.f32 %v1251, -1.4531521
    %v1268 = vadd.f32 %v1252, -1.4531521
    %v1269 = vadd.f32 %v1253, -1.4531521
    %v1270 = vadd.f32 %v1254, -1.4531521
    %v1271 = vadd.f32 %v1255, -1.4531521
    %v1272 = vmul.f32 %v1014, %v1256
    %v1273 = vmul.f32 %v1029, %v1257
    %v1274 = vmul.f32 %v1044, %v1258
    %v1275 = vmul.f32 %v1059, %v1259
    %v1276 = vmul.f32 %v1074, %v1260
    %v1277 = vmul.f32 %v1089, %v1261
    %v1278 = vmul.f32 %v1104, %v1262
    %v1279 = vmul.f32 %v1119, %v1263
    %v1280 = vmul.f32 %v1134, %v1264
    %v1281 = vmul.f32 %v1149, %v1265
    %v1282 = vmul.f32 %v1164, %v1266
    %v1283 = vmul.f32 %v1179, %v1267
    %v1284 = vmul.f32 %v1194, %v1268
    %v1285 = vmul.f32 %v1209, %v1269
    %v1286 = vmul.f32 %v1224, %v1270
    %v1287 = vmul.f32 %v1239, %v1271
    %v1288 = vadd.f32 %v1272, 1.4214138
    %v1289 = vadd.f32 %v1273, 1.4214138
    %v1290 = vadd.f32 %v1274, 1.4214138
    %v1291 = vadd.f32 %v1275, 1.4214138
    %v1292 = vadd.f32 %v1276, 1.4214138
    %v1293 = vadd.f32 %v1277, 1.4214138
    %v1294 = vadd.f32 %v1278, 1.4214138
    %v1295 = vadd.f32 %v1279, 1.4214138
    %v1296 = vadd.f32 %v1280, 1.4214138
    %v1297 = vadd.f32 %v1281, 1.4214138
    %v1298 = vadd.f32 %v1282, 1.4214138
    %v1299 = vadd.f32 %v1283, 1.4214138
    %v1300 = vadd.f32 %v1284, 1.4214138
    %v1301 = vadd.f32 %v1285, 1.4214138
    %v1302 = vadd.f32 %v1286, 1.4214138
    %v1303 = vadd.f32 %v1287, 1.4214138
    %v1304 = vmul.f32 %v1014, %v1288
    %v1305 = vmul.f32 %v1029, %v1289
    %v1306 = vmul.f32 %v1044, %v1290
    %v1307 = vmul.f32 %v1059, %v1291
    %v1308 = vmul.f32 %v1074, %v1292
    %v1309 = vmul.f32 %v1089, %v1293
    %v1310 = vmul.f32 %v1104, %v1294
    %v1311 = vmul.f32 %v1119, %v1295
    %v1312 = vmul.f32 %v1134, %v1296
    %v1313 = vmul.f32 %v1149, %v1297
    %v1314 = vmul.f32 %v1164, %v1298
    %v1315 = vmul.f32 %v1179, %v1299
    %v1316 = vmul.f32 %v1194, %v1300
    %v1317 = vmul.f32 %v1209, %v1301
    %v1318 = vmul.f32 %v1224, %v1302
    %v1319 = vmul.f32 %v1239, %v1303
    %v1320 = vadd.f32 %v1304, -0.28449672
    %v1321 = vadd.f32 %v1305, -0.28449672
    %v1322 = vadd.f32 %v1306, -0.28449672
    %v1323 = vadd.f32 %v1307, -0.28449672
    %v1324 = vadd.f32 %v1308, -0.28449672
    %v1325 = vadd.f32 %v1309, -0.28449672
    %v1326 = vadd.f32 %v1310, -0.28449672
    %v1327 = vadd.f32 %v1311, -0.28449672
    %v1328 = vadd.f32 %v1312, -0.28449672
    %v1329 = vadd.f32 %v1313, -0.28449672
    %v1330 = vadd.f32 %v1314, -0.28449672
    %v1331 = vadd.f32 %v1315, -0.28449672
    %v1332 = vadd.f32 %v1316, -0.28449672
    %v1333 = vadd.f32 %v1317, -0.28449672
    %v1334 = vadd.f32 %v1318, -0.28449672
    %v1335 = vadd.f32 %v1319, -0.28449672
    %v1336 = vmul.f32 %v1014, %v1320
    %v1337 = vmul.f32 %v1029, %v1321
    %v1338 = vmul.f32 %v1044, %v1322
    %v1339 = vmul.f32 %v1059, %v1323
    %v1340 = vmul.f32 %v1074, %v1324
    %v1341 = vmul.f32 %v1089, %v1325
    %v1342 = vmul.f32 %v1104, %v1326
    %v1343 = vmul.f32 %v1119, %v1327
    %v1344 = vmul.f32 %v1134, %v1328
    %v1345 = vmul.f32 %v1149, %v1329
    %v1346 = vmul.f32 %v1164, %v1330
    %v1347 = vmul.f32 %v1179, %v1331
    %v1348 = vmul.f32 %v1194, %v1332
    %v1349 = vmul.f32 %v1209, %v1333
    %v1350 = vmul.f32 %v1224, %v1334
    %v1351 = vmul.f32 %v1239, %v1335
    %v1352 = vadd.f32 %v1336, 0.2548296
    %v1353 = vadd.f32 %v1337, 0.2548296
    %v1354 = vadd.f32 %v1338, 0.2548296
    %v1355 = vadd.f32 %v1339, 0.2548296
    %v1356 = vadd.f32 %v1340, 0.2548296
    %v1357 = vadd.f32 %v1341, 0.2548296
    %v1358 = vadd.f32 %v1342, 0.2548296
    %v1359 = vadd.f32 %v1343, 0.2548296
    %v1360 = vadd.f32 %v1344, 0.2548296
    %v1361 = vadd.f32 %v1345, 0.2548296
    %v1362 = vadd.f32 %v1346, 0.2548296
    %v1363 = vadd.f32 %v1347, 0.2548296
    %v1364 = vadd.f32 %v1348, 0.2548296
    %v1365 = vadd.f32 %v1349, 0.2548296
    %v1366 = vadd.f32 %v1350, 0.2548296
    %v1367 = vadd.f32 %v1351, 0.2548296
    %v1368 = vmul.f32 %v1014, %v1352
    %v1369 = vmul.f32 %v1029, %v1353
    %v1370 = vmul.f32 %v1044, %v1354
    %v1371 = vmul.f32 %v1059, %v1355
    %v1372 = vmul.f32 %v1074, %v1356
    %v1373 = vmul.f32 %v1089, %v1357
    %v1374 = vmul.f32 %v1104, %v1358
    %v1375 = vmul.f32 %v1119, %v1359
    %v1376 = vmul.f32 %v1134, %v1360
    %v1377 = vmul.f32 %v1149, %v1361
    %v1378 = vmul.f32 %v1164, %v1362
    %v1379 = vmul.f32 %v1179, %v1363
    %v1380 = vmul.f32 %v1194, %v1364
    %v1381 = vmul.f32 %v1209, %v1365
    %v1382 = vmul.f32 %v1224, %v1366
    %v1383 = vmul.f32 %v1239, %v1367
    %v1384 = vsub.f32 0.0, %v952
    %v1385 = vsub.f32 0.0, %v953
    %v1386 = vsub.f32 0.0, %v954
    %v1387 = vsub.f32 0.0, %v955
    %v1388 = vsub.f32 0.0, %v956
    %v1389 = vsub.f32 0.0, %v957
    %v1390 = vsub.f32 0.0, %v958
    %v1391 = vsub.f32 0.0, %v959
    %v1392 = vsub.f32 0.0, %v960
    %v1393 = vsub.f32 0.0, %v961
    %v1394 = vsub.f32 0.0, %v962
    %v1395 = vsub.f32 0.0, %v963
    %v1396 = vsub.f32 0.0, %v964
    %v1397 = vsub.f32 0.0, %v965
    %v1398 = vsub.f32 0.0, %v966
    %v1399 = vsub.f32 0.0, %v967
    %v1400 = vmul.f32 %v1384, %v952
    %v1401 = vmul.f32 %v1385, %v953
    %v1402 = vmul.f32 %v1386, %v954
    %v1403 = vmul.f32 %v1387, %v955
    %v1404 = vmul.f32 %v1388, %v956
    %v1405 = vmul.f32 %v1389, %v957
    %v1406 = vmul.f32 %v1390, %v958
    %v1407 = vmul.f32 %v1391, %v959
    %v1408 = vmul.f32 %v1392, %v960
    %v1409 = vmul.f32 %v1393, %v961
    %v1410 = vmul.f32 %v1394, %v962
    %v1411 = vmul.f32 %v1395, %v963
    %v1412 = vmul.f32 %v1396, %v964
    %v1413 = vmul.f32 %v1397, %v965
    %v1414 = vmul.f32 %v1398, %v966
    %v1415 = vmul.f32 %v1399, %v967
    %v1416 = vmul.f32 %v1400, 1.442695
    %v1417 = vpow.pop %v1416
    %v1418 = vmul.f32 %v1401, 1.442695
    %v1419 = vpow.pop %v1418
    %v1420 = vmul.f32 %v1402, 1.442695
    %v1421 = vpow.pop %v1420
    %v1422 = vmul.f32 %v1403, 1.442695
    %v1423 = vpow.pop %v1422
    %v1424 = vmul.f32 %v1404, 1.442695
    %v1425 = vpow.pop %v1424
    %v1426 = vmul.f32 %v1405, 1.442695
    %v1427 = vpow.pop %v1426
    %v1428 = vmul.f32 %v1406, 1.442695
    %v1429 = vpow.pop %v1428
    %v1430 = vmul.f32 %v1407, 1.442695
    %v1431 = vpow.pop %v1430
    %v1432 = vmul.f32 %v1408, 1.442695
    %v1433 = vpow.pop %v1432
    %v1434 = vmul.f32 %v1409, 1.442695
    %v1435 = vpow.pop %v1434
    %v1436 = vmul.f32 %v1410, 1.442695
    %v1437 = vpow.pop %v1436
    %v1438 = vmul.f32 %v1411, 1.442695
    %v1439 = vpow.pop %v1438
    %v1440 = vmul.f32 %v1412, 1.442695
    %v1441 = vpow.pop %v1440
    %v1442 = vmul.f32 %v1413, 1.442695
    %v1443 = vpow.pop %v1442
    %v1444 = vmul.f32 %v1414, 1.442695
    %v1445 = vpow.pop %v1444
    %v1446 = vmul.f32 %v1415, 1.442695
    %v1447 = vpow.pop %v1446
    %v1448 = vmul.f32 %v1368, %v1417
    %v1449 = vmul.f32 %v1369, %v1419
    %v1450 = vmul.f32 %v1370, %v1421
    %v1451 = vmul.f32 %v1371, %v1423
    %v1452 = vmul.f32 %v1372, %v1425
    %v1453 = vmul.f32 %v1373, %v1427
    %v1454 = vmul.f32 %v1374, %v1429
    %v1455 = vmul.f32 %v1375, %v1431
    %v1456 = vmul.f32 %v1376, %v1433
    %v1457 = vmul.f32 %v1377, %v1435
    %v1458 = vmul.f32 %v1378, %v1437
    %v1459 = vmul.f32 %v1379, %v1439
    %v1460 = vmul.f32 %v1380, %v1441
    %v1461 = vmul.f32 %v1381, %v1443
    %v1462 = vmul.f32 %v1382, %v1445
    %v1463 = vmul.f32 %v1383, %v1447
    %v1464 = vsub.f32 1.0, %v1448
    %v1465 = vsub.f32 1.0, %v1449
    %v1466 = vsub.f32 1.0, %v1450
    %v1467 = vsub.f32 1.0, %v1451
    %v1468 = vsub.f32 1.0, %v1452
    %v1469 = vsub.f32 1.0, %v1453
    %v1470 = vsub.f32 1.0, %v1454
    %v1471 = vsub.f32 1.0, %v1455
    %v1472 = vsub.f32 1.0, %v1456
    %v1473 = vsub.f32 1.0, %v1457
    %v1474 = vsub.f32 1.0, %v1458
    %v1475 = vsub.f32 1.0, %v1459
    %v1476 = vsub.f32 1.0, %v1460
    %v1477 = vsub.f32 1.0, %v1461
    %v1478 = vsub.f32 1.0, %v1462
    %v1479 = vsub.f32 1.0, %v1463
    %vm1480 = vcmp.ge.f32.partialorder %v936, 0.0
    %vm1481 = vcmp.ge.f32.partialorder %v937, 0.0
    %vm1482 = vcmp.ge.f32.partialorder %v938, 0.0
    %vm1483 = vcmp.ge.f32.partialorder %v939, 0.0
    %vm1484 = vcmp.ge.f32.partialorder %v940, 0.0
    %vm1485 = vcmp.ge.f32.partialorder %v941, 0.0
    %vm1486 = vcmp.ge.f32.partialorder %v942, 0.0
    %vm1487 = vcmp.ge.f32.partialorder %v943, 0.0
    %vm1488 = vcmp.ge.f32.partialorder %v944, 0.0
    %vm1489 = vcmp.ge.f32.partialorder %v945, 0.0
    %vm1490 = vcmp.ge.f32.partialorder %v946, 0.0
    %vm1491 = vcmp.ge.f32.partialorder %v947, 0.0
    %vm1492 = vcmp.ge.f32.partialorder %v948, 0.0
    %vm1493 = vcmp.ge.f32.partialorder %v949, 0.0
    %vm1494 = vcmp.ge.f32.partialorder %v950, 0.0
    %vm1495 = vcmp.ge.f32.partialorder %v951, 0.0
    %v1496 = vsub.f32 0.0, %v1464
    %v1497 = vsub.f32 0.0, %v1465
    %v1498 = vsub.f32 0.0, %v1466
    %v1499 = vsub.f32 0.0, %v1467
    %v1500 = vsub.f32 0.0, %v1468
    %v1501 = vsub.f32 0.0, %v1469
    %v1502 = vsub.f32 0.0, %v1470
    %v1503 = vsub.f32 0.0, %v1471
    %v1504 = vsub.f32 0.0, %v1472
    %v1505 = vsub.f32 0.0, %v1473
    %v1506 = vsub.f32 0.0, %v1474
    %v1507 = vsub.f32 0.0, %v1475
    %v1508 = vsub.f32 0.0, %v1476
    %v1509 = vsub.f32 0.0, %v1477
    %v1510 = vsub.f32 0.0, %v1478
    %v1511 = vsub.f32 0.0, %v1479
    %v1512 = vsel %vm1480, %v1464, %v1496
    %v1513 = vsel %vm1481, %v1465, %v1497
    %v1514 = vsel %vm1482, %v1466, %v1498
    %v1515 = vsel %vm1483, %v1467, %v1499
    %v1516 = vsel %vm1484, %v1468, %v1500
    %v1517 = vsel %vm1485, %v1469, %v1501
    %v1518 = vsel %vm1486, %v1470, %v1502
    %v1519 = vsel %vm1487, %v1471, %v1503
    %v1520 = vsel %vm1488, %v1472, %v1504
    %v1521 = vsel %vm1489, %v1473, %v1505
    %v1522 = vsel %vm1490, %v1474, %v1506
    %v1523 = vsel %vm1491, %v1475, %v1507
    %v1524 = vsel %vm1492, %v1476, %v1508
    %v1525 = vsel %vm1493, %v1477, %v1509
    %v1526 = vsel %vm1494, %v1478, %v1510
    %v1527 = vsel %vm1495, %v1479, %v1511
    %v1528 = vadd.f32 %v1512, 1.0
    %v1529 = vadd.f32 %v1513, 1.0
    %v1530 = vadd.f32 %v1514, 1.0
    %v1531 = vadd.f32 %v1515, 1.0
    %v1532 = vadd.f32 %v1516, 1.0
    %v1533 = vadd.f32 %v1517, 1.0
    %v1534 = vadd.f32 %v1518, 1.0
    %v1535 = vadd.f32 %v1519, 1.0
    %v1536 = vadd.f32 %v1520, 1.0
    %v1537 = vadd.f32 %v1521, 1.0
    %v1538 = vadd.f32 %v1522, 1.0
    %v1539 = vadd.f32 %v1523, 1.0
    %v1540 = vadd.f32 %v1524, 1.0
    %v1541 = vadd.f32 %v1525, 1.0
    %v1542 = vadd.f32 %v1526, 1.0
    %v1543 = vadd.f32 %v1527, 1.0
    %v1544 = vmul.f32 %v920, %v1528
    %v1545 = vmul.f32 %v921, %v1529
    %v1546 = vmul.f32 %v922, %v1530
    %v1547 = vmul.f32 %v923, %v1531
    %v1548 = vmul.f32 %v924, %v1532
    %v1549 = vmul.f32 %v925, %v1533
    %v1550 = vmul.f32 %v926, %v1534
    %v1551 = vmul.f32 %v927, %v1535
    %v1552 = vmul.f32 %v928, %v1536
    %v1553 = vmul.f32 %v929, %v1537
    %v1554 = vmul.f32 %v930, %v1538
    %v1555 = vmul.f32 %v931, %v1539
    %v1556 = vmul.f32 %v932, %v1540
    %v1557 = vmul.f32 %v933, %v1541
    %v1558 = vmul.f32 %v934, %v1542
    %v1559 = vmul.f32 %v935, %v1543
    %v1560 = vld [vmem:[#allocation3] sm:$0xff]
    %v1561 = vld [vmem:[#allocation3 + $0x8] sm:$0xff]
    %v1562 = vld [vmem:[#allocation3 + $0x10] sm:$0xff]
    %v1563 = vld [vmem:[#allocation3 + $0x18] sm:$0xff]
    %v1564 = vld [vmem:[#allocation3 + $0x20] sm:$0xff]
    %v1565 = vld [vmem:[#allocation3 + $0x28] sm:$0xff]
    %v1566 = vld [vmem:[#allocation3 + $0x30] sm:$0xff]
    %v1567 = vld [vmem:[#allocation3 + $0x38] sm:$0xff]
    %v1568 = vld [vmem:[#allocation3 + $0x40] sm:$0xff]
    %v1569 = vld [vmem:[#allocation3 + $0x48] sm:$0xff]
    %v1570 = vld [vmem:[#allocation3 + $0x50] sm:$0xff]
    %v1571 = vld [vmem:[#allocation3 + $0x58] sm:$0xff]
    %v1572 = vld [vmem:[#allocation3 + $0x60] sm:$0xff]
    %v1573 = vld [vmem:[#allocation3 + $0x68] sm:$0xff]
    %v1574 = vld [vmem:[#allocation3 + $0x70] sm:$0xff]
    %v1575 = vld [vmem:[#allocation3 + $0x78] sm:$0xff]
    %v1576 = vld [vmem:[%s6] sm:$0x1]
    %v1578 = vperm.slane %v1576, 0
    %1580 = vmatpush.msra.mxu0 %v1575
    %1581 = vmatpush.msra.mxu0 %v1574
    %1582 = vmatpush.msra.mxu0 %v1573
    %1583 = vmatpush.msra.mxu0 %v1572
    %1584 = vmatpush.msra.mxu0 %v1571
    %1585 = vmatpush.msra.mxu0 %v1570
    %1586 = vmatpush.msra.mxu0 %v1569
    %1587 = vmatpush.msra.mxu0 %v1568
    %1588 = vmatpush.msra.mxu0 %v1567
    %1589 = vmatpush.msra.mxu0 %v1566
    %1590 = vmatpush.msra.mxu0 %v1565
    %1591 = vmatpush.msra.mxu0 %v1564
    %1592 = vmatpush.msra.mxu0 %v1563
    %1593 = vmatpush.msra.mxu0 %v1562
    %1594 = vmatpush.msra.mxu0 %v1561
    %1595 = vmatpush.msra.mxu0 %v1560
    %1596 = vmatmul.f32.gmra.mxu0 %v1544
    %v1597 = vpop.f32.mrf.mxu0
    %v1598 = vadd.f32 %v1578, %v1597
    %1599 = vmatmul.f32.gmra.mxu0 %v1545
    %v1600 = vpop.f32.mrf.mxu0
    %v1601 = vadd.f32 %v1578, %v1600
    %1602 = vmatmul.f32.gmra.mxu0 %v1546
    %v1603 = vpop.f32.mrf.mxu0
    %v1604 = vadd.f32 %v1578, %v1603
    %1605 = vmatmul.f32.gmra.mxu0 %v1547
    %v1606 = vpop.f32.mrf.mxu0
    %v1607 = vadd.f32 %v1578, %v1606
    %1608 = vmatmul.f32.gmra.mxu0 %v1548
    %v1609 = vpop.f32.mrf.mxu0
    %v1610 = vadd.f32 %v1578, %v1609
    %1611 = vmatmul.f32.gmra.mxu0 %v1549
    %v1612 = vpop.f32.mrf.mxu0
    %v1613 = vadd.f32 %v1578, %v1612
    %1614 = vmatmul.f32.gmra.mxu0 %v1550
    %v1615 = vpop.f32.mrf.mxu0
    %v1616 = vadd.f32 %v1578, %v1615
    %1617 = vmatmul.f32.gmra.mxu0 %v1551
    %v1618 = vpop.f32.mrf.mxu0
    %v1619 = vadd.f32 %v1578, %v1618
    %1620 = vmatmul.f32.gmra.mxu0 %v1552
    %v1621 = vpop.f32.mrf.mxu0
    %v1622 = vadd.f32 %v1578, %v1621
    %1623 = vmatmul.f32.gmra.mxu0 %v1553
    %v1624 = vpop.f32.mrf.mxu0
    %v1625 = vadd.f32 %v1578, %v1624
    %1626 = vmatmul.f32.gmra.mxu0 %v1554
    %v1627 = vpop.f32.mrf.mxu0
    %v1628 = vadd.f32 %v1578, %v1627
    %1629 = vmatmul.f32.gmra.mxu0 %v1555
    %v1630 = vpop.f32.mrf.mxu0
    %v1631 = vadd.f32 %v1578, %v1630
    %1632 = vmatmul.f32.gmra.mxu0 %v1556
    %v1633 = vpop.f32.mrf.mxu0
    %v1634 = vadd.f32 %v1578, %v1633
    %1635 = vmatmul.f32.gmra.mxu0 %v1557
    %v1636 = vpop.f32.mrf.mxu0
    %v1637 = vadd.f32 %v1578, %v1636
    %1638 = vmatmul.f32.gmra.mxu0 %v1558
    %v1639 = vpop.f32.mrf.mxu0
    %v1640 = vadd.f32 %v1578, %v1639
    %1641 = vmatmul.f32.gmra.mxu0 %v1559
    %v1642 = vpop.f32.mrf.mxu0
    %v1643 = vadd.f32 %v1578, %v1642
    %1644 = vdwg.mxu0
    %v1645 = vmul.f32 %v1598, 0.5
    %v1646 = vmul.f32 %v1601, 0.5
    %v1647 = vmul.f32 %v1604, 0.5
    %v1648 = vmul.f32 %v1607, 0.5
    %v1649 = vmul.f32 %v1610, 0.5
    %v1650 = vmul.f32 %v1613, 0.5
    %v1651 = vmul.f32 %v1616, 0.5
    %v1652 = vmul.f32 %v1619, 0.5
    %v1653 = vmul.f32 %v1622, 0.5
    %v1654 = vmul.f32 %v1625, 0.5
    %v1655 = vmul.f32 %v1628, 0.5
    %v1656 = vmul.f32 %v1631, 0.5
    %v1657 = vmul.f32 %v1634, 0.5
    %v1658 = vmul.f32 %v1637, 0.5
    %v1659 = vmul.f32 %v1640, 0.5
    %v1660 = vmul.f32 %v1643, 0.5
    %v1661 = vmul.f32 %v1598, 0.70710677
    %v1662 = vmul.f32 %v1601, 0.70710677
    %v1663 = vmul.f32 %v1604, 0.70710677
    %v1664 = vmul.f32 %v1607, 0.70710677
    %v1665 = vmul.f32 %v1610, 0.70710677
    %v1666 = vmul.f32 %v1613, 0.70710677
    %v1667 = vmul.f32 %v1616, 0.70710677
    %v1668 = vmul.f32 %v1619, 0.70710677
    %v1669 = vmul.f32 %v1622, 0.70710677
    %v1670 = vmul.f32 %v1625, 0.70710677
    %v1671 = vmul.f32 %v1628, 0.70710677
    %v1672 = vmul.f32 %v1631, 0.70710677
    %v1673 = vmul.f32 %v1634, 0.70710677
    %v1674 = vmul.f32 %v1637, 0.70710677
    %v1675 = vmul.f32 %v1640, 0.70710677
    %v1676 = vmul.f32 %v1643, 0.70710677
    %v1677 = vand.u32 2147483647, %v1661
    %v1678 = vand.u32 2147483647, %v1662
    %v1679 = vand.u32 2147483647, %v1663
    %v1680 = vand.u32 2147483647, %v1664
    %v1681 = vand.u32 2147483647, %v1665
    %v1682 = vand.u32 2147483647, %v1666
    %v1683 = vand.u32 2147483647, %v1667
    %v1684 = vand.u32 2147483647, %v1668
    %v1685 = vand.u32 2147483647, %v1669
    %v1686 = vand.u32 2147483647, %v1670
    %v1687 = vand.u32 2147483647, %v1671
    %v1688 = vand.u32 2147483647, %v1672
    %v1689 = vand.u32 2147483647, %v1673
    %v1690 = vand.u32 2147483647, %v1674
    %v1691 = vand.u32 2147483647, %v1675
    %v1692 = vand.u32 2147483647, %v1676
    %v1693 = vmul.f32 %v1677, 0.3275911
    %v1694 = vmul.f32 %v1678, 0.3275911
    %v1695 = vmul.f32 %v1679, 0.3275911
    %v1696 = vmul.f32 %v1680, 0.3275911
    %v1697 = vmul.f32 %v1681, 0.3275911
    %v1698 = vmul.f32 %v1682, 0.3275911
    %v1699 = vmul.f32 %v1683, 0.3275911
    %v1700 = vmul.f32 %v1684, 0.3275911
    %v1701 = vmul.f32 %v1685, 0.3275911
    %v1702 = vmul.f32 %v1686, 0.3275911
    %v1703 = vmul.f32 %v1687, 0.3275911
    %v1704 = vmul.f32 %v1688, 0.3275911
    %v1705 = vmul.f32 %v1689, 0.3275911
    %v1706 = vmul.f32 %v1690, 0.3275911
    %v1707 = vmul.f32 %v1691, 0.3275911
    %v1708 = vmul.f32 %v1692, 0.3275911
    %v1709 = vadd.f32 %v1693, 1.0
    %v1710 = vadd.f32 %v1694, 1.0
    %v1711 = vadd.f32 %v1695, 1.0
    %v1712 = vadd.f32 %v1696, 1.0
    %v1713 = vadd.f32 %v1697, 1.0
    %v1714 = vadd.f32 %v1698, 1.0
    %v1715 = vadd.f32 %v1699, 1.0
    %v1716 = vadd.f32 %v1700, 1.0
    %v1717 = vadd.f32 %v1701, 1.0
    %v1718 = vadd.f32 %v1702, 1.0
    %v1719 = vadd.f32 %v1703, 1.0
    %v1720 = vadd.f32 %v1704, 1.0
    %v1721 = vadd.f32 %v1705, 1.0
    %v1722 = vadd.f32 %v1706, 1.0
    %v1723 = vadd.f32 %v1707, 1.0
    %v1724 = vadd.f32 %v1708, 1.0
    %v1725 = vrcp.pop %v1709
    %v1726 = vmul.f32 %v1709, %v1725
    %v1727 = vsub.f32 1.0, %v1726
    %v1728 = vmul.f32 %v1725, %v1727
    %v1729 = vadd.f32 %v1725, %v1728
    %vm1730 = vweird.f32 %v1709
    %vm1731 = vweird.f32 %v1725
    %vm1732 = vmor %vm1730, %vm1731
    %v1733 = vsel %vm1732, %v1725, %v1729
    %v1734 = vand.u32 2147483647, %v1709
    %vm1735 = vcmp.eq.f32.partialorder %v1734, 8.507059e+37
    %v1736 = vand.u32 %v1709, 2147483648
    %v1737 = vor.u32 1.1754944e-38, %v1736
    %v1738 = vsel %vm1735, %v1737, %v1733
    %v1739 = vmul.f32 1.0, %v1738
    %v1740 = vrcp.pop %v1710
    %v1741 = vmul.f32 %v1710, %v1740
    %v1742 = vsub.f32 1.0, %v1741
    %v1743 = vmul.f32 %v1740, %v1742
    %v1744 = vadd.f32 %v1740, %v1743
    %vm1745 = vweird.f32 %v1710
    %vm1746 = vweird.f32 %v1740
    %vm1747 = vmor %vm1745, %vm1746
    %v1748 = vsel %vm1747, %v1740, %v1744
    %v1749 = vand.u32 2147483647, %v1710
    %vm1750 = vcmp.eq.f32.partialorder %v1749, 8.507059e+37
    %v1751 = vand.u32 %v1710, 2147483648
    %v1752 = vor.u32 1.1754944e-38, %v1751
    %v1753 = vsel %vm1750, %v1752, %v1748
    %v1754 = vmul.f32 1.0, %v1753
    %v1755 = vrcp.pop %v1711
    %v1756 = vmul.f32 %v1711, %v1755
    %v1757 = vsub.f32 1.0, %v1756
    %v1758 = vmul.f32 %v1755, %v1757
    %v1759 = vadd.f32 %v1755, %v1758
    %vm1760 = vweird.f32 %v1711
    %vm1761 = vweird.f32 %v1755
    %vm1762 = vmor %vm1760, %vm1761
    %v1763 = vsel %vm1762, %v1755, %v1759
    %v1764 = vand.u32 2147483647, %v1711
    %vm1765 = vcmp.eq.f32.partialorder %v1764, 8.507059e+37
    %v1766 = vand.u32 %v1711, 2147483648
    %v1767 = vor.u32 1.1754944e-38, %v1766
    %v1768 = vsel %vm1765, %v1767, %v1763
    %v1769 = vmul.f32 1.0, %v1768
    %v1770 = vrcp.pop %v1712
    %v1771 = vmul.f32 %v1712, %v1770
    %v1772 = vsub.f32 1.0, %v1771
    %v1773 = vmul.f32 %v1770, %v1772
    %v1774 = vadd.f32 %v1770, %v1773
    %vm1775 = vweird.f32 %v1712
    %vm1776 = vweird.f32 %v1770
    %vm1777 = vmor %vm1775, %vm1776
    %v1778 = vsel %vm1777, %v1770, %v1774
    %v1779 = vand.u32 2147483647, %v1712
    %vm1780 = vcmp.eq.f32.partialorder %v1779, 8.507059e+37
    %v1781 = vand.u32 %v1712, 2147483648
    %v1782 = vor.u32 1.1754944e-38, %v1781
    %v1783 = vsel %vm1780, %v1782, %v1778
    %v1784 = vmul.f32 1.0, %v1783
    %v1785 = vrcp.pop %v1713
    %v1786 = vmul.f32 %v1713, %v1785
    %v1787 = vsub.f32 1.0, %v1786
    %v1788 = vmul.f32 %v1785, %v1787
    %v1789 = vadd.f32 %v1785, %v1788
    %vm1790 = vweird.f32 %v1713
    %vm1791 = vweird.f32 %v1785
    %vm1792 = vmor %vm1790, %vm1791
    %v1793 = vsel %vm1792, %v1785, %v1789
    %v1794 = vand.u32 2147483647, %v1713
    %vm1795 = vcmp.eq.f32.partialorder %v1794, 8.507059e+37
    %v1796 = vand.u32 %v1713, 2147483648
    %v1797 = vor.u32 1.1754944e-38, %v1796
    %v1798 = vsel %vm1795, %v1797, %v1793
    %v1799 = vmul.f32 1.0, %v1798
    %v1800 = vrcp.pop %v1714
    %v1801 = vmul.f32 %v1714, %v1800
    %v1802 = vsub.f32 1.0, %v1801
    %v1803 = vmul.f32 %v1800, %v1802
    %v1804 = vadd.f32 %v1800, %v1803
    %vm1805 = vweird.f32 %v1714
    %vm1806 = vweird.f32 %v1800
    %vm1807 = vmor %vm1805, %vm1806
    %v1808 = vsel %vm1807, %v1800, %v1804
    %v1809 = vand.u32 2147483647, %v1714
    %vm1810 = vcmp.eq.f32.partialorder %v1809, 8.507059e+37
    %v1811 = vand.u32 %v1714, 2147483648
    %v1812 = vor.u32 1.1754944e-38, %v1811
    %v1813 = vsel %vm1810, %v1812, %v1808
    %v1814 = vmul.f32 1.0, %v1813
    %v1815 = vrcp.pop %v1715
    %v1816 = vmul.f32 %v1715, %v1815
    %v1817 = vsub.f32 1.0, %v1816
    %v1818 = vmul.f32 %v1815, %v1817
    %v1819 = vadd.f32 %v1815, %v1818
    %vm1820 = vweird.f32 %v1715
    %vm1821 = vweird.f32 %v1815
    %vm1822 = vmor %vm1820, %vm1821
    %v1823 = vsel %vm1822, %v1815, %v1819
    %v1824 = vand.u32 2147483647, %v1715
    %vm1825 = vcmp.eq.f32.partialorder %v1824, 8.507059e+37
    %v1826 = vand.u32 %v1715, 2147483648
    %v1827 = vor.u32 1.1754944e-38, %v1826
    %v1828 = vsel %vm1825, %v1827, %v1823
    %v1829 = vmul.f32 1.0, %v1828
    %v1830 = vrcp.pop %v1716
    %v1831 = vmul.f32 %v1716, %v1830
    %v1832 = vsub.f32 1.0, %v1831
    %v1833 = vmul.f32 %v1830, %v1832
    %v1834 = vadd.f32 %v1830, %v1833
    %vm1835 = vweird.f32 %v1716
    %vm1836 = vweird.f32 %v1830
    %vm1837 = vmor %vm1835, %vm1836
    %v1838 = vsel %vm1837, %v1830, %v1834
    %v1839 = vand.u32 2147483647, %v1716
    %vm1840 = vcmp.eq.f32.partialorder %v1839, 8.507059e+37
    %v1841 = vand.u32 %v1716, 2147483648
    %v1842 = vor.u32 1.1754944e-38, %v1841
    %v1843 = vsel %vm1840, %v1842, %v1838
    %v1844 = vmul.f32 1.0, %v1843
    %v1845 = vrcp.pop %v1717
    %v1846 = vmul.f32 %v1717, %v1845
    %v1847 = vsub.f32 1.0, %v1846
    %v1848 = vmul.f32 %v1845, %v1847
    %v1849 = vadd.f32 %v1845, %v1848
    %vm1850 = vweird.f32 %v1717
    %vm1851 = vweird.f32 %v1845
    %vm1852 = vmor %vm1850, %vm1851
    %v1853 = vsel %vm1852, %v1845, %v1849
    %v1854 = vand.u32 2147483647, %v1717
    %vm1855 = vcmp.eq.f32.partialorder %v1854, 8.507059e+37
    %v1856 = vand.u32 %v1717, 2147483648
    %v1857 = vor.u32 1.1754944e-38, %v1856
    %v1858 = vsel %vm1855, %v1857, %v1853
    %v1859 = vmul.f32 1.0, %v1858
    %v1860 = vrcp.pop %v1718
    %v1861 = vmul.f32 %v1718, %v1860
    %v1862 = vsub.f32 1.0, %v1861
    %v1863 = vmul.f32 %v1860, %v1862
    %v1864 = vadd.f32 %v1860, %v1863
    %vm1865 = vweird.f32 %v1718
    %vm1866 = vweird.f32 %v1860
    %vm1867 = vmor %vm1865, %vm1866
    %v1868 = vsel %vm1867, %v1860, %v1864
    %v1869 = vand.u32 2147483647, %v1718
    %vm1870 = vcmp.eq.f32.partialorder %v1869, 8.507059e+37
    %v1871 = vand.u32 %v1718, 2147483648
    %v1872 = vor.u32 1.1754944e-38, %v1871
    %v1873 = vsel %vm1870, %v1872, %v1868
    %v1874 = vmul.f32 1.0, %v1873
    %v1875 = vrcp.pop %v1719
    %v1876 = vmul.f32 %v1719, %v1875
    %v1877 = vsub.f32 1.0, %v1876
    %v1878 = vmul.f32 %v1875, %v1877
    %v1879 = vadd.f32 %v1875, %v1878
    %vm1880 = vweird.f32 %v1719
    %vm1881 = vweird.f32 %v1875
    %vm1882 = vmor %vm1880, %vm1881
    %v1883 = vsel %vm1882, %v1875, %v1879
    %v1884 = vand.u32 2147483647, %v1719
    %vm1885 = vcmp.eq.f32.partialorder %v1884, 8.507059e+37
    %v1886 = vand.u32 %v1719, 2147483648
    %v1887 = vor.u32 1.1754944e-38, %v1886
    %v1888 = vsel %vm1885, %v1887, %v1883
    %v1889 = vmul.f32 1.0, %v1888
    %v1890 = vrcp.pop %v1720
    %v1891 = vmul.f32 %v1720, %v1890
    %v1892 = vsub.f32 1.0, %v1891
    %v1893 = vmul.f32 %v1890, %v1892
    %v1894 = vadd.f32 %v1890, %v1893
    %vm1895 = vweird.f32 %v1720
    %vm1896 = vweird.f32 %v1890
    %vm1897 = vmor %vm1895, %vm1896
    %v1898 = vsel %vm1897, %v1890, %v1894
    %v1899 = vand.u32 2147483647, %v1720
    %vm1900 = vcmp.eq.f32.partialorder %v1899, 8.507059e+37
    %v1901 = vand.u32 %v1720, 2147483648
    %v1902 = vor.u32 1.1754944e-38, %v1901
    %v1903 = vsel %vm1900, %v1902, %v1898
    %v1904 = vmul.f32 1.0, %v1903
    %v1905 = vrcp.pop %v1721
    %v1906 = vmul.f32 %v1721, %v1905
    %v1907 = vsub.f32 1.0, %v1906
    %v1908 = vmul.f32 %v1905, %v1907
    %v1909 = vadd.f32 %v1905, %v1908
    %vm1910 = vweird.f32 %v1721
    %vm1911 = vweird.f32 %v1905
    %vm1912 = vmor %vm1910, %vm1911
    %v1913 = vsel %vm1912, %v1905, %v1909
    %v1914 = vand.u32 2147483647, %v1721
    %vm1915 = vcmp.eq.f32.partialorder %v1914, 8.507059e+37
    %v1916 = vand.u32 %v1721, 2147483648
    %v1917 = vor.u32 1.1754944e-38, %v1916
    %v1918 = vsel %vm1915, %v1917, %v1913
    %v1919 = vmul.f32 1.0, %v1918
    %v1920 = vrcp.pop %v1722
    %v1921 = vmul.f32 %v1722, %v1920
    %v1922 = vsub.f32 1.0, %v1921
    %v1923 = vmul.f32 %v1920, %v1922
    %v1924 = vadd.f32 %v1920, %v1923
    %vm1925 = vweird.f32 %v1722
    %vm1926 = vweird.f32 %v1920
    %vm1927 = vmor %vm1925, %vm1926
    %v1928 = vsel %vm1927, %v1920, %v1924
    %v1929 = vand.u32 2147483647, %v1722
    %vm1930 = vcmp.eq.f32.partialorder %v1929, 8.507059e+37
    %v1931 = vand.u32 %v1722, 2147483648
    %v1932 = vor.u32 1.1754944e-38, %v1931
    %v1933 = vsel %vm1930, %v1932, %v1928
    %v1934 = vmul.f32 1.0, %v1933
    %v1935 = vrcp.pop %v1723
    %v1936 = vmul.f32 %v1723, %v1935
    %v1937 = vsub.f32 1.0, %v1936
    %v1938 = vmul.f32 %v1935, %v1937
    %v1939 = vadd.f32 %v1935, %v1938
    %vm1940 = vweird.f32 %v1723
    %vm1941 = vweird.f32 %v1935
    %vm1942 = vmor %vm1940, %vm1941
    %v1943 = vsel %vm1942, %v1935, %v1939
    %v1944 = vand.u32 2147483647, %v1723
    %vm1945 = vcmp.eq.f32.partialorder %v1944, 8.507059e+37
    %v1946 = vand.u32 %v1723, 2147483648
    %v1947 = vor.u32 1.1754944e-38, %v1946
    %v1948 = vsel %vm1945, %v1947, %v1943
    %v1949 = vmul.f32 1.0, %v1948
    %v1950 = vrcp.pop %v1724
    %v1951 = vmul.f32 %v1724, %v1950
    %v1952 = vsub.f32 1.0, %v1951
    %v1953 = vmul.f32 %v1950, %v1952
    %v1954 = vadd.f32 %v1950, %v1953
    %vm1955 = vweird.f32 %v1724
    %vm1956 = vweird.f32 %v1950
    %vm1957 = vmor %vm1955, %vm1956
    %v1958 = vsel %vm1957, %v1950, %v1954
    %v1959 = vand.u32 2147483647, %v1724
    %vm1960 = vcmp.eq.f32.partialorder %v1959, 8.507059e+37
    %v1961 = vand.u32 %v1724, 2147483648
    %v1962 = vor.u32 1.1754944e-38, %v1961
    %v1963 = vsel %vm1960, %v1962, %v1958
    %v1964 = vmul.f32 1.0, %v1963
    %v1965 = vmul.f32 %v1739, 1.0614054
    %v1966 = vmul.f32 %v1754, 1.0614054
    %v1967 = vmul.f32 %v1769, 1.0614054
    %v1968 = vmul.f32 %v1784, 1.0614054
    %v1969 = vmul.f32 %v1799, 1.0614054
    %v1970 = vmul.f32 %v1814, 1.0614054
    %v1971 = vmul.f32 %v1829, 1.0614054
    %v1972 = vmul.f32 %v1844, 1.0614054
    %v1973 = vmul.f32 %v1859, 1.0614054
    %v1974 = vmul.f32 %v1874, 1.0614054
    %v1975 = vmul.f32 %v1889, 1.0614054
    %v1976 = vmul.f32 %v1904, 1.0614054
    %v1977 = vmul.f32 %v1919, 1.0614054
    %v1978 = vmul.f32 %v1934, 1.0614054
    %v1979 = vmul.f32 %v1949, 1.0614054
    %v1980 = vmul.f32 %v1964, 1.0614054
    %v1981 = vadd.f32 %v1965, -1.4531521
    %v1982 = vadd.f32 %v1966, -1.4531521
    %v1983 = vadd.f32 %v1967, -1.4531521
    %v1984 = vadd.f32 %v1968, -1.4531521
    %v1985 = vadd.f32 %v1969, -1.4531521
    %v1986 = vadd.f32 %v1970, -1.4531521
    %v1987 = vadd.f32 %v1971, -1.4531521
    %v1988 = vadd.f32 %v1972, -1.4531521
    %v1989 = vadd.f32 %v1973, -1.4531521
    %v1990 = vadd.f32 %v1974, -1.4531521
    %v1991 = vadd.f32 %v1975, -1.4531521
    %v1992 = vadd.f32 %v1976, -1.4531521
    %v1993 = vadd.f32 %v1977, -1.4531521
    %v1994 = vadd.f32 %v1978, -1.4531521
    %v1995 = vadd.f32 %v1979, -1.4531521
    %v1996 = vadd.f32 %v1980, -1.4531521
    %v1997 = vmul.f32 %v1739, %v1981
    %v1998 = vmul.f32 %v1754, %v1982
    %v1999 = vmul.f32 %v1769, %v1983
    %v2000 = vmul.f32 %v1784, %v1984
    %v2001 = vmul.f32 %v1799, %v1985
    %v2002 = vmul.f32 %v1814, %v1986
    %v2003 = vmul.f32 %v1829, %v1987
    %v2004 = vmul.f32 %v1844, %v1988
    %v2005 = vmul.f32 %v1859, %v1989
    %v2006 = vmul.f32 %v1874, %v1990
    %v2007 = vmul.f32 %v1889, %v1991
    %v2008 = vmul.f32 %v1904, %v1992
    %v2009 = vmul.f32 %v1919, %v1993
    %v2010 = vmul.f32 %v1934, %v1994
    %v2011 = vmul.f32 %v1949, %v1995
    %v2012 = vmul.f32 %v1964, %v1996
    %v2013 = vadd.f32 %v1997, 1.4214138
    %v2014 = vadd.f32 %v1998, 1.4214138
    %v2015 = vadd.f32 %v1999, 1.4214138
    %v2016 = vadd.f32 %v2000, 1.4214138
    %v2017 = vadd.f32 %v2001, 1.4214138
    %v2018 = vadd.f32 %v2002, 1.4214138
    %v2019 = vadd.f32 %v2003, 1.4214138
    %v2020 = vadd.f32 %v2004, 1.4214138
    %v2021 = vadd.f32 %v2005, 1.4214138
    %v2022 = vadd.f32 %v2006, 1.4214138
    %v2023 = vadd.f32 %v2007, 1.4214138
    %v2024 = vadd.f32 %v2008, 1.4214138
    %v2025 = vadd.f32 %v2009, 1.4214138
    %v2026 = vadd.f32 %v2010, 1.4214138
    %v2027 = vadd.f32 %v2011, 1.4214138
    %v2028 = vadd.f32 %v2012, 1.4214138
    %v2029 = vmul.f32 %v1739, %v2013
    %v2030 = vmul.f32 %v1754, %v2014
    %v2031 = vmul.f32 %v1769, %v2015
    %v2032 = vmul.f32 %v1784, %v2016
    %v2033 = vmul.f32 %v1799, %v2017
    %v2034 = vmul.f32 %v1814, %v2018
    %v2035 = vmul.f32 %v1829, %v2019
    %v2036 = vmul.f32 %v1844, %v2020
    %v2037 = vmul.f32 %v1859, %v2021
    %v2038 = vmul.f32 %v1874, %v2022
    %v2039 = vmul.f32 %v1889, %v2023
    %v2040 = vmul.f32 %v1904, %v2024
    %v2041 = vmul.f32 %v1919, %v2025
    %v2042 = vmul.f32 %v1934, %v2026
    %v2043 = vmul.f32 %v1949, %v2027
    %v2044 = vmul.f32 %v1964, %v2028
    %v2045 = vadd.f32 %v2029, -0.28449672
    %v2046 = vadd.f32 %v2030, -0.28449672
    %v2047 = vadd.f32 %v2031, -0.28449672
    %v2048 = vadd.f32 %v2032, -0.28449672
    %v2049 = vadd.f32 %v2033, -0.28449672
    %v2050 = vadd.f32 %v2034, -0.28449672
    %v2051 = vadd.f32 %v2035, -0.28449672
    %v2052 = vadd.f32 %v2036, -0.28449672
    %v2053 = vadd.f32 %v2037, -0.28449672
    %v2054 = vadd.f32 %v2038, -0.28449672
    %v2055 = vadd.f32 %v2039, -0.28449672
    %v2056 = vadd.f32 %v2040, -0.28449672
    %v2057 = vadd.f32 %v2041, -0.28449672
    %v2058 = vadd.f32 %v2042, -0.28449672
    %v2059 = vadd.f32 %v2043, -0.28449672
    %v2060 = vadd.f32 %v2044, -0.28449672
    %v2061 = vmul.f32 %v1739, %v2045
    %v2062 = vmul.f32 %v1754, %v2046
    %v2063 = vmul.f32 %v1769, %v2047
    %v2064 = vmul.f32 %v1784, %v2048
    %v2065 = vmul.f32 %v1799, %v2049
    %v2066 = vmul.f32 %v1814, %v2050
    %v2067 = vmul.f32 %v1829, %v2051
    %v2068 = vmul.f32 %v1844, %v2052
    %v2069 = vmul.f32 %v1859, %v2053
    %v2070 = vmul.f32 %v1874, %v2054
    %v2071 = vmul.f32 %v1889, %v2055
    %v2072 = vmul.f32 %v1904, %v2056
    %v2073 = vmul.f32 %v1919, %v2057
    %v2074 = vmul.f32 %v1934, %v2058
    %v2075 = vmul.f32 %v1949, %v2059
    %v2076 = vmul.f32 %v1964, %v2060
    %v2077 = vadd.f32 %v2061, 0.2548296
    %v2078 = vadd.f32 %v2062, 0.2548296
    %v2079 = vadd.f32 %v2063, 0.2548296
    %v2080 = vadd.f32 %v2064, 0.2548296
    %v2081 = vadd.f32 %v2065, 0.2548296
    %v2082 = vadd.f32 %v2066, 0.2548296
    %v2083 = vadd.f32 %v2067, 0.2548296
    %v2084 = vadd.f32 %v2068, 0.2548296
    %v2085 = vadd.f32 %v2069, 0.2548296
    %v2086 = vadd.f32 %v2070, 0.2548296
    %v2087 = vadd.f32 %v2071, 0.2548296
    %v2088 = vadd.f32 %v2072, 0.2548296
    %v2089 = vadd.f32 %v2073, 0.2548296
    %v2090 = vadd.f32 %v2074, 0.2548296
    %v2091 = vadd.f32 %v2075, 0.2548296
    %v2092 = vadd.f32 %v2076, 0.2548296
    %v2093 = vmul.f32 %v1739, %v2077
    %v2094 = vmul.f32 %v1754, %v2078
    %v2095 = vmul.f32 %v1769, %v2079
    %v2096 = vmul.f32 %v1784, %v2080
    %v2097 = vmul.f32 %v1799, %v2081
    %v2098 = vmul.f32 %v1814, %v2082
    %v2099 = vmul.f32 %v1829, %v2083
    %v2100 = vmul.f32 %v1844, %v2084
    %v2101 = vmul.f32 %v1859, %v2085
    %v2102 = vmul.f32 %v1874, %v2086
    %v2103 = vmul.f32 %v1889, %v2087
    %v2104 = vmul.f32 %v1904, %v2088
    %v2105 = vmul.f32 %v1919, %v2089
    %v2106 = vmul.f32 %v1934, %v2090
    %v2107 = vmul.f32 %v1949, %v2091
    %v2108 = vmul.f32 %v1964, %v2092
    %v2109 = vsub.f32 0.0, %v1677
    %v2110 = vsub.f32 0.0, %v1678
    %v2111 = vsub.f32 0.0, %v1679
    %v2112 = vsub.f32 0.0, %v1680
    %v2113 = vsub.f32 0.0, %v1681
    %v2114 = vsub.f32 0.0, %v1682
    %v2115 = vsub.f32 0.0, %v1683
    %v2116 = vsub.f32 0.0, %v1684
    %v2117 = vsub.f32 0.0, %v1685
    %v2118 = vsub.f32 0.0, %v1686
    %v2119 = vsub.f32 0.0, %v1687
    %v2120 = vsub.f32 0.0, %v1688
    %v2121 = vsub.f32 0.0, %v1689
    %v2122 = vsub.f32 0.0, %v1690
    %v2123 = vsub.f32 0.0, %v1691
    %v2124 = vsub.f32 0.0, %v1692
    %v2125 = vmul.f32 %v2109, %v1677
    %v2126 = vmul.f32 %v2110, %v1678
    %v2127 = vmul.f32 %v2111, %v1679
    %v2128 = vmul.f32 %v2112, %v1680
    %v2129 = vmul.f32 %v2113, %v1681
    %v2130 = vmul.f32 %v2114, %v1682
    %v2131 = vmul.f32 %v2115, %v1683
    %v2132 = vmul.f32 %v2116, %v1684
    %v2133 = vmul.f32 %v2117, %v1685
    %v2134 = vmul.f32 %v2118, %v1686
    %v2135 = vmul.f32 %v2119, %v1687
    %v2136 = vmul.f32 %v2120, %v1688
    %v2137 = vmul.f32 %v2121, %v1689
    %v2138 = vmul.f32 %v2122, %v1690
    %v2139 = vmul.f32 %v2123, %v1691
    %v2140 = vmul.f32 %v2124, %v1692
    %v2141 = vmul.f32 %v2125, 1.442695
    %v2142 = vpow.pop %v2141
    %v2143 = vmul.f32 %v2126, 1.442695
    %v2144 = vpow.pop %v2143
    %v2145 = vmul.f32 %v2127, 1.442695
    %v2146 = vpow.pop %v2145
    %v2147 = vmul.f32 %v2128, 1.442695
    %v2148 = vpow.pop %v2147
    %v2149 = vmul.f32 %v2129, 1.442695
    %v2150 = vpow.pop %v2149
    %v2151 = vmul.f32 %v2130, 1.442695
    %v2152 = vpow.pop %v2151
    %v2153 = vmul.f32 %v2131, 1.442695
    %v2154 = vpow.pop %v2153
    %v2155 = vmul.f32 %v2132, 1.442695
    %v2156 = vpow.pop %v2155
    %v2157 = vmul.f32 %v2133, 1.442695
    %v2158 = vpow.pop %v2157
    %v2159 = vmul.f32 %v2134, 1.442695
    %v2160 = vpow.pop %v2159
    %v2161 = vmul.f32 %v2135, 1.442695
    %v2162 = vpow.pop %v2161
    %v2163 = vmul.f32 %v2136, 1.442695
    %v2164 = vpow.pop %v2163
    %v2165 = vmul.f32 %v2137, 1.442695
    %v2166 = vpow.pop %v2165
    %v2167 = vmul.f32 %v2138, 1.442695
    %v2168 = vpow.pop %v2167
    %v2169 = vmul.f32 %v2139, 1.442695
    %v2170 = vpow.pop %v2169
    %v2171 = vmul.f32 %v2140, 1.442695
    %v2172 = vpow.pop %v2171
    %v2173 = vmul.f32 %v2093, %v2142
    %v2174 = vmul.f32 %v2094, %v2144
    %v2175 = vmul.f32 %v2095, %v2146
    %v2176 = vmul.f32 %v2096, %v2148
    %v2177 = vmul.f32 %v2097, %v2150
    %v2178 = vmul.f32 %v2098, %v2152
    %v2179 = vmul.f32 %v2099, %v2154
    %v2180 = vmul.f32 %v2100, %v2156
    %v2181 = vmul.f32 %v2101, %v2158
    %v2182 = vmul.f32 %v2102, %v2160
    %v2183 = vmul.f32 %v2103, %v2162
    %v2184 = vmul.f32 %v2104, %v2164
    %v2185 = vmul.f32 %v2105, %v2166
    %v2186 = vmul.f32 %v2106, %v2168
    %v2187 = vmul.f32 %v2107, %v2170
    %v2188 = vmul.f32 %v2108, %v2172
    %v2189 = vsub.f32 1.0, %v2173
    %v2190 = vsub.f32 1.0, %v2174
    %v2191 = vsub.f32 1.0, %v2175
    %v2192 = vsub.f32 1.0, %v2176
    %v2193 = vsub.f32 1.0, %v2177
    %v2194 = vsub.f32 1.0, %v2178
    %v2195 = vsub.f32 1.0, %v2179
    %v2196 = vsub.f32 1.0, %v2180
    %v2197 = vsub.f32 1.0, %v2181
    %v2198 = vsub.f32 1.0, %v2182
    %v2199 = vsub.f32 1.0, %v2183
    %v2200 = vsub.f32 1.0, %v2184
    %v2201 = vsub.f32 1.0, %v2185
    %v2202 = vsub.f32 1.0, %v2186
    %v2203 = vsub.f32 1.0, %v2187
    %v2204 = vsub.f32 1.0, %v2188
    %vm2205 = vcmp.ge.f32.partialorder %v1661, 0.0
    %vm2206 = vcmp.ge.f32.partialorder %v1662, 0.0
    %vm2207 = vcmp.ge.f32.partialorder %v1663, 0.0
    %vm2208 = vcmp.ge.f32.partialorder %v1664, 0.0
    %vm2209 = vcmp.ge.f32.partialorder %v1665, 0.0
    %vm2210 = vcmp.ge.f32.partialorder %v1666, 0.0
    %vm2211 = vcmp.ge.f32.partialorder %v1667, 0.0
    %vm2212 = vcmp.ge.f32.partialorder %v1668, 0.0
    %vm2213 = vcmp.ge.f32.partialorder %v1669, 0.0
    %vm2214 = vcmp.ge.f32.partialorder %v1670, 0.0
    %vm2215 = vcmp.ge.f32.partialorder %v1671, 0.0
    %vm2216 = vcmp.ge.f32.partialorder %v1672, 0.0
    %vm2217 = vcmp.ge.f32.partialorder %v1673, 0.0
    %vm2218 = vcmp.ge.f32.partialorder %v1674, 0.0
    %vm2219 = vcmp.ge.f32.partialorder %v1675, 0.0
    %vm2220 = vcmp.ge.f32.partialorder %v1676, 0.0
    %v2221 = vsub.f32 0.0, %v2189
    %v2222 = vsub.f32 0.0, %v2190
    %v2223 = vsub.f32 0.0, %v2191
    %v2224 = vsub.f32 0.0, %v2192
    %v2225 = vsub.f32 0.0, %v2193
    %v2226 = vsub.f32 0.0, %v2194
    %v2227 = vsub.f32 0.0, %v2195
    %v2228 = vsub.f32 0.0, %v2196
    %v2229 = vsub.f32 0.0, %v2197
    %v2230 = vsub.f32 0.0, %v2198
    %v2231 = vsub.f32 0.0, %v2199
    %v2232 = vsub.f32 0.0, %v2200
    %v2233 = vsub.f32 0.0, %v2201
    %v2234 = vsub.f32 0.0, %v2202
    %v2235 = vsub.f32 0.0, %v2203
    %v2236 = vsub.f32 0.0, %v2204
    %v2237 = vsel %vm2205, %v2189, %v2221
    %v2238 = vsel %vm2206, %v2190, %v2222
    %v2239 = vsel %vm2207, %v2191, %v2223
    %v2240 = vsel %vm2208, %v2192, %v2224
    %v2241 = vsel %vm2209, %v2193, %v2225
    %v2242 = vsel %vm2210, %v2194, %v2226
    %v2243 = vsel %vm2211, %v2195, %v2227
    %v2244 = vsel %vm2212, %v2196, %v2228
    %v2245 = vsel %vm2213, %v2197, %v2229
    %v2246 = vsel %vm2214, %v2198, %v2230
    %v2247 = vsel %vm2215, %v2199, %v2231
    %v2248 = vsel %vm2216, %v2200, %v2232
    %v2249 = vsel %vm2217, %v2201, %v2233
    %v2250 = vsel %vm2218, %v2202, %v2234
    %v2251 = vsel %vm2219, %v2203, %v2235
    %v2252 = vsel %vm2220, %v2204, %v2236
    %v2253 = vadd.f32 %v2237, 1.0
    %v2254 = vadd.f32 %v2238, 1.0
    %v2255 = vadd.f32 %v2239, 1.0
    %v2256 = vadd.f32 %v2240, 1.0
    %v2257 = vadd.f32 %v2241, 1.0
    %v2258 = vadd.f32 %v2242, 1.0
    %v2259 = vadd.f32 %v2243, 1.0
    %v2260 = vadd.f32 %v2244, 1.0
    %v2261 = vadd.f32 %v2245, 1.0
    %v2262 = vadd.f32 %v2246, 1.0
    %v2263 = vadd.f32 %v2247, 1.0
    %v2264 = vadd.f32 %v2248, 1.0
    %v2265 = vadd.f32 %v2249, 1.0
    %v2266 = vadd.f32 %v2250, 1.0
    %v2267 = vadd.f32 %v2251, 1.0
    %v2268 = vadd.f32 %v2252, 1.0
    %v2269 = vmul.f32 %v1645, %v2253
    %v2270 = vmul.f32 %v1646, %v2254
    %v2271 = vmul.f32 %v1647, %v2255
    %v2272 = vmul.f32 %v1648, %v2256
    %v2273 = vmul.f32 %v1649, %v2257
    %v2274 = vmul.f32 %v1650, %v2258
    %v2275 = vmul.f32 %v1651, %v2259
    %v2276 = vmul.f32 %v1652, %v2260
    %v2277 = vmul.f32 %v1653, %v2261
    %v2278 = vmul.f32 %v1654, %v2262
    %v2279 = vmul.f32 %v1655, %v2263
    %v2280 = vmul.f32 %v1656, %v2264
    %v2281 = vmul.f32 %v1657, %v2265
    %v2282 = vmul.f32 %v1658, %v2266
    %v2283 = vmul.f32 %v1659, %v2267
    %v2284 = vmul.f32 %v1660, %v2268
    %v2285 = vld [vmem:[%s7] sm:$0x1]
    %v2286 = vld [vmem:[#allocation2] sm:$0x1]
    %2288 = vset.pattern.permute.xlu0 0
    %2289 = vperm.xlu0 %2288, %v2286
    %v2290 = vpop.permute.xlu0 %2289
    %v2292 = vperm.slane %v2290, 0
    %2293 = vmatpush.xpose.msra.mxu0 %v2284
    %2294 = vmatpush.xpose.msra.mxu0 %v2283
    %2295 = vmatpush.xpose.msra.mxu0 %v2282
    %2296 = vmatpush.xpose.msra.mxu0 %v2281
    %2297 = vmatpush.xpose.msra.mxu0 %v2280
    %2298 = vmatpush.xpose.msra.mxu0 %v2279
    %2299 = vmatpush.xpose.msra.mxu0 %v2278
    %2300 = vmatpush.xpose.msra.mxu0 %v2277
    %2301 = vmatpush.xpose.msra.mxu0 %v2276
    %2302 = vmatpush.xpose.msra.mxu0 %v2275
    %2303 = vmatpush.xpose.msra.mxu0 %v2274
    %2304 = vmatpush.xpose.msra.mxu0 %v2273
    %2305 = vmatpush.xpose.msra.mxu0 %v2272
    %2306 = vmatpush.xpose.msra.mxu0 %v2271
    %2307 = vmatpush.xpose.msra.mxu0 %v2270
    %2308 = vmatpush.xpose.msra.mxu0 %v2269
    %2309 = vmatmul.f32.gmra.mxu0 %v2285
    %v2310 = vpop.f32.mrf.mxu0
    %v2311 = vadd.f32 %v2292, %v2310
    %2312 = vdwg.mxu0
    %v2313 = vmax.f32 %v2311, 0.0
    %v2314 = vand.u32 2147483647, %v2311
    %v2315 = vsub.f32 0.0, %v2314
    %v2316 = vmul.f32 %v2315, 1.442695
    %v2317 = vpow.pop %v2316
    %v2318 = vadd.f32 %v2317, 1.0
    %v2319 = vlog2.pop %v2318
    %v2320 = vmul.f32 %v2319, 0.6931472
    %v2321 = vadd.f32 %v2313, %v2320
    %2322 = vst [vmem:[#allocation6] sm:$0x1] %v2321
    // Predicated region
    $region42: #{tpu_custom_call.1} parent=1 // pred_check
      _
    $region43: #{tpu_custom_call.1} parent=1 // pred_check_branch
      %2324 = sbr.rel (0) target = $region45
    $region44: #{tpu_custom_call.1} parent=1 // pred_region
      %2326 = vsyncadd [#allocation5], 0
      %s2328 = sshll.u32 [#allocation6], 4
      %s2329 = int_to_ptr.vmem [resolvable:$true] %s2328
      %s2330 = sshll.u32 %s9, 4
      %s2331 = int_to_ptr.hbm [resolvable:$true] %s2330
      %2333 = dma.vmem_to_hbm [thread:$0]  %s2329, 16, %s2331, [#allocation5]
    $region45: #{tpu_custom_call.1} parent=1 // pred_fallthru
      _
    // Predicated region
    $region46: #{tpu_custom_call.1} parent=1 // pred_check
      _
    $region47: #{tpu_custom_call.1} parent=1 // pred_check_branch
      %2335 = sbr.rel (0) target = $region49
    $region48: #{tpu_custom_call.1} parent=1 // pred_region
      %2337 = dma.done [#allocation5], 16
    $region49: #{tpu_custom_call.1} parent=1 // pred_fallthru
      _
    %2338 = vsyncpa [#allocation4], 1
    %2339 = vsyncpa [#allocation5], 1

</llo_original>
